<compile_context>
chip_gen: v7x
topology: tpu7x:2x2x1
jax: 0.10.0
libtpu: 0.0.40
codegen_flags: <defaults>
</compile_context>

<pallas_src>
import jax
import jax.numpy as jnp
from jax import lax
from jax.experimental import pallas as pl
from jax.experimental.pallas import tpu as pltpu


def _round_up(a, m):
    return (a + m - 1) // m * m


def _cdiv(a, b):
    return (a + b - 1) // b


def _vmem_capacity_bytes():
    """Physical VMEM of the attached TPU; conservative (v7x) fallback."""
    try:
        return int(pltpu.get_tpu_info().vmem_capacity_bytes)
    except Exception:
        return 64 * 1024 * 1024


def _kernel_vmem_bytes(T, bn_tile, H, O_pad):
    """Rough per-program VMEM footprint (double-buffered pipelined blocks)."""
    G = 4 * H
    gx = 2 * T * bn_tile * G * 4                       # pipelined gx input
    weights = 2 * ((H * G + 2 * H * G + H * O_pad) * 2  # bf16 weights, 2 bufs
                   + (G + O_pad) * 4)                    # f32 biases, 2 bufs
    out = 2 * bn_tile * O_pad * 4                        # pipelined output
    live = bn_tile * (2 * H * 2 + 2 * H * 4 + 3 * G * 4)  # h/c carries + gates
    return gx + weights + out + live


def _choose_tile(Bn, T, H, O_pad):
    """Pick bn_tile: <=128 rows, minimal padding, >=2 tiles when possible
    (v7x has 2 TensorCores), and footprint within a generation-aware budget."""
    budget = int(_vmem_capacity_bytes() * 0.6)
    min_tiles = 2 if Bn > 8 else 1
    num_tiles = max(_cdiv(Bn, 128), min_tiles)
    while True:
        bn_tile = _round_up(_cdiv(Bn, num_tiles), 8)
        if bn_tile == 8 or _kernel_vmem_bytes(T, bn_tile, H, O_pad) <= budget:
            break
        num_tiles += 1
    Bn_pad = _round_up(Bn, bn_tile)
    return bn_tile, Bn_pad


# ----------------------------------------------------------------------------
# Kernel: 2-layer LSTM recurrence (layer-0 pre-gates precomputed) + out proj.
# ----------------------------------------------------------------------------
def lstm_kernel(gx_ref,        # [T, Bn, 4H] f32   layer-0 pre-gates (x@Wih0+b0)
                whh0_ref,      # [H, 4H]     bf16  gate order [i|f|o|g]
                w1_ref,        # [2H, 4H]    bf16  rows = [wih1 ; whh1]
                b1_ref,        # [1, 4H]     f32   (b_ih_l1 + b_hh_l1)
                wout_ref,      # [H, O_pad]  bf16  zero-padded columns
                bout_ref,      # [1, O_pad]  f32
                out_ref):      # [Bn, O_pad] f32
    T, Bn, G = gx_ref.shape
    H = whh0_ref.shape[0]

    # Weights / biases hoisted out of the recurrent loop.
    whh0 = whh0_ref[...]
    w1 = w1_ref[...]
    b1_b = jnp.broadcast_to(b1_ref[...], (Bn, G))        # hoisted broadcast

    def sigmoid(x):
        # One EUP push (tanh) instead of exp + reciprocal.
        return 0.5 * jnp.tanh(0.5 * x) + 0.5

    def gate_math(gates, c):
        # gate layout [i | f | o | g]: one sigmoid over 3H lanes, one tanh.
        sg = sigmoid(gates[:, : 3 * H])
        gg = jnp.tanh(gates[:, 3 * H:])
        c_new = sg[:, H:2 * H] * c + sg[:, :H] * gg       # f*c + i*g   (f32)
        h_new = (sg[:, 2 * H:3 * H] * jnp.tanh(c_new)).astype(jnp.bfloat16)
        return h_new, c_new

    def step(t, carry):
        h0, h1, c0, c1 = carry                             # h bf16, c f32
        # layer 0: only the recurrent matmul is on the critical path
        g0 = gx_ref[t] + jnp.dot(h0, whh0, preferred_element_type=jnp.float32)
        h0, c0 = gate_math(g0, c0)
        # layer 1: single fused matmul over the stacked [h0 | h1] state
        h01 = jnp.concatenate([h0, h1], axis=-1)           # [Bn, 2H] bf16
        g1 = jnp.dot(h01, w1, preferred_element_type=jnp.float32) + b1_b
        h1, c1 = gate_math(g1, c1)
        return (h0, h1, c0, c1)

    hz = jnp.zeros((Bn, H), jnp.bfloat16)
    cz = jnp.zeros((Bn, H), jnp.float32)
    _, h1, _, _ = lax.fori_loop(0, T, step, (hz, hz, cz, cz),
                                unroll=min(T, 8))

    # Lane-dense epilogue: output_layer on the last hidden of the top layer,
    # written as a full [Bn, O_pad] slab (unmasked stores).
    out_ref[...] = (jnp.dot(h1, wout_ref[...],
                            preferred_element_type=jnp.float32)
                    + bout_ref[...])


# ----------------------------------------------------------------------------
# pallas_call wrapper
# ----------------------------------------------------------------------------
def lstm_last_hidden_proj(x_tbd, params):
    """x_tbd: [T, Bn, D] f32 -> [Bn_pad, O_pad] f32 (caller slices the pad)."""
    T, Bn, D = x_tbd.shape
    H = params["whh0"].shape[0]
    G = 4 * H
    O_pad = params["wout"].shape[1]

    # Hoisted layer-0 input projection: one big, embarrassingly parallel f32
    # matmul in XLA.  Feeds the kernel a lane-dense [T, Bn, 4H] block — no
    # T-scaled VMEM scratch and no D->128 lane-padded x buffers in the kernel.
    gx = jnp.matmul(x_tbd, params["wih0"]) + params["b0"]   # [T, Bn, 4H] f32

    bn_tile, Bn_pad = _choose_tile(Bn, T, H, O_pad)
    if Bn_pad != Bn:
        gx = jnp.pad(gx, ((0, 0), (0, Bn_pad - Bn), (0, 0)))

    def resident(arr):
        # Full-array block, same block every grid step -> stays in VMEM.
        return pl.BlockSpec(arr.shape, lambda i: (0,) * arr.ndim)

    grid_spec = pltpu.PrefetchScalarGridSpec(
        num_scalar_prefetch=0,
        grid=(Bn_pad // bn_tile,),
        in_specs=[
            pl.BlockSpec((T, bn_tile, G), lambda i: (0, i, 0)),   # gx (pipelined)
            resident(params["whh0"]),
            resident(params["w1"]),
            resident(params["b1"]),
            resident(params["wout"]),
            resident(params["bout"]),
        ],
        out_specs=pl.BlockSpec((bn_tile, O_pad), lambda i: (i, 0)),
    )

    footprint = _kernel_vmem_bytes(T, bn_tile, H, O_pad)
    vmem_limit = min(
        max(32 * 1024 * 1024, int(1.5 * footprint) + 4 * 1024 * 1024),
        int(_vmem_capacity_bytes() * 0.85),
        100 * 1024 * 1024,
    )

    return pl.pallas_call(
        lstm_kernel,
        out_shape=jax.ShapeDtypeStruct((Bn_pad, O_pad), jnp.float32),
        grid_spec=grid_spec,
        compiler_params=pltpu.CompilerParams(
            dimension_semantics=("parallel",),     # megacore / v7x 2-TC sharding
            vmem_limit_bytes=vmem_limit,
        ),
    )(gx, params["whh0"], params["w1"], params["b1"],
      params["wout"], params["bout"])


# ----------------------------------------------------------------------------
# Parameters (PyTorch layout -> kernel layout)
# ----------------------------------------------------------------------------
def init_params(key, input_dim, hidden_dim, output_dim):
    """PyTorch-layout params: uniform(-1/sqrt(H), 1/sqrt(H)), gate order [i,f,g,o]."""
    H = hidden_dim
    bound = 1.0 / (H ** 0.5)
    ks = jax.random.split(key, 10)
    u = lambda k, shape: jax.random.uniform(k, shape, jnp.float32, -bound, bound)
    return {
        "w_ih_l0": u(ks[0], (4 * H, input_dim)),
        "w_hh_l0": u(ks[1], (4 * H, H)),
        "b_ih_l0": u(ks[2], (4 * H,)),
        "b_hh_l0": u(ks[3], (4 * H,)),
        "w_ih_l1": u(ks[4], (4 * H, H)),
        "w_hh_l1": u(ks[5], (4 * H, H)),
        "b_ih_l1": u(ks[6], (4 * H,)),
        "b_hh_l1": u(ks[7], (4 * H,)),
        "w_out":   u(ks[8], (output_dim, H)),
        "b_out":   u(ks[9], (output_dim,)),
    }


def _reorder_ifgo_to_ifog(w_t, H):
    """Columns are PyTorch gate order [i|f|g|o]; reorder to [i|f|o|g]."""
    i, f, g, o = (w_t[:, 0:H], w_t[:, H:2 * H],
                  w_t[:, 2 * H:3 * H], w_t[:, 3 * H:4 * H])
    return jnp.concatenate([i, f, o, g], axis=1)


def prepare_params(p, hidden_dim, output_dim):
    """Transpose to [in, 4H], reorder gates to [i|f|o|g], fuse biases, stack
    layer-1 weights into one [2H,4H] matrix, pad the output projection to a
    lane-dense 128-column slab, cast recurrent matmul weights to bf16."""
    H = hidden_dim
    O = output_dim
    O_pad = _round_up(O, 128)
    r = lambda w: _reorder_ifgo_to_ifog(w, H)
    wout = jnp.zeros((H, O_pad), jnp.float32).at[:, :O].set(p["w_out"].T)
    bout = jnp.zeros((1, O_pad), jnp.float32).at[:, :O].set(p["b_out"][None, :])
    w1 = jnp.concatenate([r(p["w_ih_l1"].T), r(p["w_hh_l1"].T)], axis=0)  # [2H,4H]
    return {
        "wih0": r(p["w_ih_l0"].T),                           # f32 (XLA projection)
        "b0":   r((p["b_ih_l0"] + p["b_hh_l0"])[None, :]),   # f32 [1,4H]
        "whh0": r(p["w_hh_l0"].T).astype(jnp.bfloat16),
        "w1":   w1.astype(jnp.bfloat16),
        "b1":   r((p["b_ih_l1"] + p["b_hh_l1"])[None, :]),
        "wout": wout.astype(jnp.bfloat16),
        "bout": bout,
        "out_dim": O,
    }


# ----------------------------------------------------------------------------
# Full forward (matches LSTMModel.forward with use_pretrained=False)
# ----------------------------------------------------------------------------
def lstm_model_forward(x, params, pred_steps=15):
    """
    x: [batch, input_seq_length, num_nodes, input_dim]  (float32)
    returns: [batch, pred_seq_length, num_nodes, output_dim]
    """
    B, T, N, D = x.shape
    O = params["out_dim"]
    Bn = B * N

    # x.permute(0, 2, 1, 3).reshape(B*N, T, D) -> time-major [T, Bn, D]
    x_reshaped = jnp.transpose(x, (0, 2, 1, 3)).reshape(Bn, T, D)
    x_tbd = jnp.transpose(x_reshaped, (1, 0, 2))

    last_proj = lstm_last_hidden_proj(x_tbd, params)[:Bn, :O]   # [Bn, O]

    # Linear(repeat(v)) == repeat(Linear(v)); then reshape/permute as the module.
    expanded = jnp.broadcast_to(last_proj[:, None, :], (Bn, pred_steps, O))
    out = expanded.reshape(B, N, pred_steps, O)
    return jnp.transpose(out, (0, 2, 1, 3))                     # [B, P, N, O]


# TODO(synk): use_pretrained=True branch (mapping_layer + rpfm_integration) not
# implemented; the module default (use_pretrained=False) is what is translated.


# ----------------------------------------------------------------------------
# Pure-JAX f32 reference (PyTorch semantics) for a sanity check
# ----------------------------------------------------------------------------
def lstm_model_forward_ref(x, raw, pred_steps=15):
    B, T, N, D = x.shape
    H = raw["w_hh_l0"].shape[1]
    Bn = B * N
    x_r = jnp.transpose(x, (0, 2, 1, 3)).reshape(Bn, T, D)

    def cell(xt, h, c, wih, whh, b):
        gates = xt @ wih.T + h @ whh.T + b
        i = jax.nn.sigmoid(gates[:, 0:H])
        f = jax.nn.sigmoid(gates[:, H:2 * H])
        g = jnp.tanh(gates[:, 2 * H:3 * H])
        o = jax.nn.sigmoid(gates[:, 3 * H:4 * H])
        c = f * c + i * g
        return o * jnp.tanh(c), c

    h0 = c0 = h1 = c1 = jnp.zeros((Bn, H), jnp.float32)
    b0 = raw["b_ih_l0"] + raw["b_hh_l0"]
    b1 = raw["b_ih_l1"] + raw["b_hh_l1"]
    for t in range(T):
        h0, c0 = cell(x_r[:, t], h0, c0, raw["w_ih_l0"], raw["w_hh_l0"], b0)
        h1, c1 = cell(h0, h1, c1, raw["w_ih_l1"], raw["w_hh_l1"], b1)
    out = h1 @ raw["w_out"].T + raw["b_out"]
    O = out.shape[-1]
    out = jnp.broadcast_to(out[:, None, :], (Bn, pred_steps, O))
    out = out.reshape(B, N, pred_steps, O)
    return jnp.transpose(out, (0, 2, 1, 3))


if __name__ == "__main__":
    batch = 2
    seq = 8
    num_nodes = 4
    input_dim = 4
    hidden_dim = 32
    output_dim = 2
    pred_steps = 15

    key = jax.random.PRNGKey(0)
    kx, kp = jax.random.split(key)
    x = jax.random.normal(kx, (batch, seq, num_nodes, input_dim), jnp.float32)

    raw = init_params(kp, input_dim, hidden_dim, output_dim)
    params = prepare_params(raw, hidden_dim, output_dim)

    fwd = jax.jit(lambda xx: lstm_model_forward(xx, params, pred_steps=pred_steps))
    out = jax.block_until_ready(fwd(x))
    assert out.shape == (batch, pred_steps, num_nodes, output_dim), out.shape

    ref = lstm_model_forward_ref(x, raw, pred_steps=pred_steps)
    assert bool(jnp.allclose(out, ref, atol=3e-2, rtol=3e-2)), (
        float(jnp.max(jnp.abs(out - ref))))

    print("KERNEL_OK")
</pallas_src>

<mosaic_0001>
module attributes {stable_mosaic.version = 11 : i64} {
  func.func @lstm_kernel(%arg0: i32, %arg1: memref<8x8x128xf32, #tpu.memory_space<vmem>>, %arg2: memref<32x128xbf16, #tpu.memory_space<vmem>>, %arg3: memref<64x128xbf16, #tpu.memory_space<vmem>>, %arg4: memref<1x128xf32, #tpu.memory_space<vmem>>, %arg5: memref<32x128xbf16, #tpu.memory_space<vmem>>, %arg6: memref<1x128xf32, #tpu.memory_space<vmem>>, %arg7: memref<8x128xf32, #tpu.memory_space<vmem>>) attributes {dimension_semantics = [#tpu.dimension_semantics<parallel>], iteration_bounds = array<i64: 1>, scalar_prefetch = 0 : i64, scratch_operands = 0 : i64, tpu.core_type = #tpu.core_type<tc>, window_params = [{transform_indices = @transform_0, window_bounds = array<i64: 8, 8, 128>}, {pipeline_mode = #tpu.pipeline_mode<synchronous>, transform_indices = @transform_1, window_bounds = array<i64: 32, 128>}, {pipeline_mode = #tpu.pipeline_mode<synchronous>, transform_indices = @transform_2, window_bounds = array<i64: 64, 128>}, {pipeline_mode = #tpu.pipeline_mode<synchronous>, transform_indices = @transform_3, window_bounds = array<i64: 1, 128>}, {pipeline_mode = #tpu.pipeline_mode<synchronous>, transform_indices = @transform_4, window_bounds = array<i64: 32, 128>}, {pipeline_mode = #tpu.pipeline_mode<synchronous>, transform_indices = @transform_5, window_bounds = array<i64: 1, 128>}, {transform_indices = @transform_6, window_bounds = array<i64: 8, 128>}]} {
    %c0 = arith.constant 0 : index
    %c0_0 = arith.constant 0 : index
    %0 = vector.load %arg2[%c0, %c0_0] : memref<32x128xbf16, #tpu.memory_space<vmem>>, vector<32x128xbf16>
    %c0_1 = arith.constant 0 : index
    %c0_2 = arith.constant 0 : index
    %1 = vector.load %arg3[%c0_1, %c0_2] : memref<64x128xbf16, #tpu.memory_space<vmem>>, vector<64x128xbf16>
    %c0_3 = arith.constant 0 : index
    %c0_4 = arith.constant 0 : index
    %2 = vector.load %arg4[%c0_3, %c0_4] : memref<1x128xf32, #tpu.memory_space<vmem>>, vector<1x128xf32>
    %3 = vector.shape_cast %2 : vector<1x128xf32> to vector<1x128xf32>
    %4 = vector.broadcast %3 : vector<1x128xf32> to vector<8x128xf32>
    %cst = arith.constant 0.000000e+00 : bf16
    %5 = vector.broadcast %cst : bf16 to vector<8x32xbf16>
    %cst_5 = arith.constant 0.000000e+00 : f32
    %6 = vector.broadcast %cst_5 : f32 to vector<8x32xf32>
    %c0_i32 = arith.constant 0 : i32
    %7 = arith.index_cast %c0_i32 : i32 to index
    %c0_6 = arith.constant 0 : index
    %c0_7 = arith.constant 0 : index
    %8 = vector.load %arg1[%7, %c0_6, %c0_7] : memref<8x8x128xf32, #tpu.memory_space<vmem>>, vector<1x8x128xf32>
    %9 = vector.shape_cast %8 : vector<1x8x128xf32> to vector<8x128xf32>
    %cst_8 = arith.constant dense<0.000000e+00> : vector<8x128xf32>
    %10 = tpu.matmul %5, %0, %cst_8 {dimension_numbers = #tpu.dot_dimension_numbers<[1], [0], [0], [1], [0, 0, 1, 1], [], []>} : vector<8x32xbf16>, vector<32x128xbf16>, vector<8x128xf32> -> vector<8x128xf32>
    %11 = arith.addf %9, %10 : vector<8x128xf32>
    %12 = vector.extract_strided_slice %11 {offsets = [0, 0], sizes = [8, 96], strides = [1, 1]} : vector<8x128xf32> to vector<8x96xf32>
    %cst_9 = arith.constant 5.000000e-01 : f32
    %13 = vector.broadcast %cst_9 : f32 to vector<8x96xf32>
    %14 = arith.mulf %13, %12 : vector<8x96xf32>
    %15 = math.tanh %14 : vector<8x96xf32>
    %cst_10 = arith.constant 5.000000e-01 : f32
    %16 = vector.broadcast %cst_10 : f32 to vector<8x96xf32>
    %17 = arith.mulf %16, %15 : vector<8x96xf32>
    %cst_11 = arith.constant 5.000000e-01 : f32
    %18 = vector.broadcast %cst_11 : f32 to vector<8x96xf32>
    %19 = arith.addf %17, %18 : vector<8x96xf32>
    %20 = vector.extract_strided_slice %11 {offsets = [0, 96], sizes = [8, 32], strides = [1, 1]} : vector<8x128xf32> to vector<8x32xf32>
    %21 = math.tanh %20 : vector<8x32xf32>
    %22 = vector.extract_strided_slice %19 {offsets = [0, 32], sizes = [8, 32], strides = [1, 1]} : vector<8x96xf32> to vector<8x32xf32>
    %23 = arith.mulf %22, %6 : vector<8x32xf32>
    %24 = vector.extract_strided_slice %19 {offsets = [0, 0], sizes = [8, 32], strides = [1, 1]} : vector<8x96xf32> to vector<8x32xf32>
    %25 = arith.mulf %24, %21 : vector<8x32xf32>
    %26 = arith.addf %23, %25 : vector<8x32xf32>
    %27 = vector.extract_strided_slice %19 {offsets = [0, 64], sizes = [8, 32], strides = [1, 1]} : vector<8x96xf32> to vector<8x32xf32>
    %28 = math.tanh %26 : vector<8x32xf32>
    %29 = arith.mulf %27, %28 : vector<8x32xf32>
    %30 = arith.truncf %29 : vector<8x32xf32> to vector<8x32xbf16>
    %31 = tpu.concatenate %30, %5 in 1 : vector<8x32xbf16>, vector<8x32xbf16> -> vector<8x64xbf16>
    %cst_12 = arith.constant dense<0.000000e+00> : vector<8x128xf32>
    %32 = tpu.matmul %31, %1, %cst_12 {dimension_numbers = #tpu.dot_dimension_numbers<[1], [0], [0], [1], [0, 0, 1, 1], [], []>} : vector<8x64xbf16>, vector<64x128xbf16>, vector<8x128xf32> -> vector<8x128xf32>
    %33 = arith.addf %32, %4 : vector<8x128xf32>
    %34 = vector.extract_strided_slice %33 {offsets = [0, 0], sizes = [8, 96], strides = [1, 1]} : vector<8x128xf32> to vector<8x96xf32>
    %cst_13 = arith.constant 5.000000e-01 : f32
    %35 = vector.broadcast %cst_13 : f32 to vector<8x96xf32>
    %36 = arith.mulf %35, %34 : vector<8x96xf32>
    %37 = math.tanh %36 : vector<8x96xf32>
    %cst_14 = arith.constant 5.000000e-01 : f32
    %38 = vector.broadcast %cst_14 : f32 to vector<8x96xf32>
    %39 = arith.mulf %38, %37 : vector<8x96xf32>
    %cst_15 = arith.constant 5.000000e-01 : f32
    %40 = vector.broadcast %cst_15 : f32 to vector<8x96xf32>
    %41 = arith.addf %39, %40 : vector<8x96xf32>
    %42 = vector.extract_strided_slice %33 {offsets = [0, 96], sizes = [8, 32], strides = [1, 1]} : vector<8x128xf32> to vector<8x32xf32>
    %43 = math.tanh %42 : vector<8x32xf32>
    %44 = vector.extract_strided_slice %41 {offsets = [0, 32], sizes = [8, 32], strides = [1, 1]} : vector<8x96xf32> to vector<8x32xf32>
    %45 = arith.mulf %44, %6 : vector<8x32xf32>
    %46 = vector.extract_strided_slice %41 {offsets = [0, 0], sizes = [8, 32], strides = [1, 1]} : vector<8x96xf32> to vector<8x32xf32>
    %47 = arith.mulf %46, %43 : vector<8x32xf32>
    %48 = arith.addf %45, %47 : vector<8x32xf32>
    %49 = vector.extract_strided_slice %41 {offsets = [0, 64], sizes = [8, 32], strides = [1, 1]} : vector<8x96xf32> to vector<8x32xf32>
    %50 = math.tanh %48 : vector<8x32xf32>
    %51 = arith.mulf %49, %50 : vector<8x32xf32>
    %52 = arith.truncf %51 : vector<8x32xf32> to vector<8x32xbf16>
    %c1_i32 = arith.constant 1 : i32
    %53 = arith.index_cast %c1_i32 : i32 to index
    %c0_16 = arith.constant 0 : index
    %c0_17 = arith.constant 0 : index
    %54 = vector.load %arg1[%53, %c0_16, %c0_17] : memref<8x8x128xf32, #tpu.memory_space<vmem>>, vector<1x8x128xf32>
    %55 = vector.shape_cast %54 : vector<1x8x128xf32> to vector<8x128xf32>
    %cst_18 = arith.constant dense<0.000000e+00> : vector<8x128xf32>
    %56 = tpu.matmul %30, %0, %cst_18 {dimension_numbers = #tpu.dot_dimension_numbers<[1], [0], [0], [1], [0, 0, 1, 1], [], []>} : vector<8x32xbf16>, vector<32x128xbf16>, vector<8x128xf32> -> vector<8x128xf32>
    %57 = arith.addf %55, %56 : vector<8x128xf32>
    %58 = vector.extract_strided_slice %57 {offsets = [0, 0], sizes = [8, 96], strides = [1, 1]} : vector<8x128xf32> to vector<8x96xf32>
    %cst_19 = arith.constant 5.000000e-01 : f32
    %59 = vector.broadcast %cst_19 : f32 to vector<8x96xf32>
    %60 = arith.mulf %59, %58 : vector<8x96xf32>
    %61 = math.tanh %60 : vector<8x96xf32>
    %cst_20 = arith.constant 5.000000e-01 : f32
    %62 = vector.broadcast %cst_20 : f32 to vector<8x96xf32>
    %63 = arith.mulf %62, %61 : vector<8x96xf32>
    %cst_21 = arith.constant 5.000000e-01 : f32
    %64 = vector.broadcast %cst_21 : f32 to vector<8x96xf32>
    %65 = arith.addf %63, %64 : vector<8x96xf32>
    %66 = vector.extract_strided_slice %57 {offsets = [0, 96], sizes = [8, 32], strides = [1, 1]} : vector<8x128xf32> to vector<8x32xf32>
    %67 = math.tanh %66 : vector<8x32xf32>
    %68 = vector.extract_strided_slice %65 {offsets = [0, 32], sizes = [8, 32], strides = [1, 1]} : vector<8x96xf32> to vector<8x32xf32>
    %69 = arith.mulf %68, %26 : vector<8x32xf32>
    %70 = vector.extract_strided_slice %65 {offsets = [0, 0], sizes = [8, 32], strides = [1, 1]} : vector<8x96xf32> to vector<8x32xf32>
    %71 = arith.mulf %70, %67 : vector<8x32xf32>
    %72 = arith.addf %69, %71 : vector<8x32xf32>
    %73 = vector.extract_strided_slice %65 {offsets = [0, 64], sizes = [8, 32], strides = [1, 1]} : vector<8x96xf32> to vector<8x32xf32>
    %74 = math.tanh %72 : vector<8x32xf32>
    %75 = arith.mulf %73, %74 : vector<8x32xf32>
    %76 = arith.truncf %75 : vector<8x32xf32> to vector<8x32xbf16>
    %77 = tpu.concatenate %76, %52 in 1 : vector<8x32xbf16>, vector<8x32xbf16> -> vector<8x64xbf16>
    %cst_22 = arith.constant dense<0.000000e+00> : vector<8x128xf32>
    %78 = tpu.matmul %77, %1, %cst_22 {dimension_numbers = #tpu.dot_dimension_numbers<[1], [0], [0], [1], [0, 0, 1, 1], [], []>} : vector<8x64xbf16>, vector<64x128xbf16>, vector<8x128xf32> -> vector<8x128xf32>
    %79 = arith.addf %78, %4 : vector<8x128xf32>
    %80 = vector.extract_strided_slice %79 {offsets = [0, 0], sizes = [8, 96], strides = [1, 1]} : vector<8x128xf32> to vector<8x96xf32>
    %cst_23 = arith.constant 5.000000e-01 : f32
    %81 = vector.broadcast %cst_23 : f32 to vector<8x96xf32>
    %82 = arith.mulf %81, %80 : vector<8x96xf32>
    %83 = math.tanh %82 : vector<8x96xf32>
    %cst_24 = arith.constant 5.000000e-01 : f32
    %84 = vector.broadcast %cst_24 : f32 to vector<8x96xf32>
    %85 = arith.mulf %84, %83 : vector<8x96xf32>
    %cst_25 = arith.constant 5.000000e-01 : f32
    %86 = vector.broadcast %cst_25 : f32 to vector<8x96xf32>
    %87 = arith.addf %85, %86 : vector<8x96xf32>
    %88 = vector.extract_strided_slice %79 {offsets = [0, 96], sizes = [8, 32], strides = [1, 1]} : vector<8x128xf32> to vector<8x32xf32>
    %89 = math.tanh %88 : vector<8x32xf32>
    %90 = vector.extract_strided_slice %87 {offsets = [0, 32], sizes = [8, 32], strides = [1, 1]} : vector<8x96xf32> to vector<8x32xf32>
    %91 = arith.mulf %90, %48 : vector<8x32xf32>
    %92 = vector.extract_strided_slice %87 {offsets = [0, 0], sizes = [8, 32], strides = [1, 1]} : vector<8x96xf32> to vector<8x32xf32>
    %93 = arith.mulf %92, %89 : vector<8x32xf32>
    %94 = arith.addf %91, %93 : vector<8x32xf32>
    %95 = vector.extract_strided_slice %87 {offsets = [0, 64], sizes = [8, 32], strides = [1, 1]} : vector<8x96xf32> to vector<8x32xf32>
    %96 = math.tanh %94 : vector<8x32xf32>
    %97 = arith.mulf %95, %96 : vector<8x32xf32>
    %98 = arith.truncf %97 : vector<8x32xf32> to vector<8x32xbf16>
    %c2_i32 = arith.constant 2 : i32
    %99 = arith.index_cast %c2_i32 : i32 to index
    %c0_26 = arith.constant 0 : index
    %c0_27 = arith.constant 0 : index
    %100 = vector.load %arg1[%99, %c0_26, %c0_27] : memref<8x8x128xf32, #tpu.memory_space<vmem>>, vector<1x8x128xf32>
    %101 = vector.shape_cast %100 : vector<1x8x128xf32> to vector<8x128xf32>
    %cst_28 = arith.constant dense<0.000000e+00> : vector<8x128xf32>
    %102 = tpu.matmul %76, %0, %cst_28 {dimension_numbers = #tpu.dot_dimension_numbers<[1], [0], [0], [1], [0, 0, 1, 1], [], []>} : vector<8x32xbf16>, vector<32x128xbf16>, vector<8x128xf32> -> vector<8x128xf32>
    %103 = arith.addf %101, %102 : vector<8x128xf32>
    %104 = vector.extract_strided_slice %103 {offsets = [0, 0], sizes = [8, 96], strides = [1, 1]} : vector<8x128xf32> to vector<8x96xf32>
    %cst_29 = arith.constant 5.000000e-01 : f32
    %105 = vector.broadcast %cst_29 : f32 to vector<8x96xf32>
    %106 = arith.mulf %105, %104 : vector<8x96xf32>
    %107 = math.tanh %106 : vector<8x96xf32>
    %cst_30 = arith.constant 5.000000e-01 : f32
    %108 = vector.broadcast %cst_30 : f32 to vector<8x96xf32>
    %109 = arith.mulf %108, %107 : vector<8x96xf32>
    %cst_31 = arith.constant 5.000000e-01 : f32
    %110 = vector.broadcast %cst_31 : f32 to vector<8x96xf32>
    %111 = arith.addf %109, %110 : vector<8x96xf32>
    %112 = vector.extract_strided_slice %103 {offsets = [0, 96], sizes = [8, 32], strides = [1, 1]} : vector<8x128xf32> to vector<8x32xf32>
    %113 = math.tanh %112 : vector<8x32xf32>
    %114 = vector.extract_strided_slice %111 {offsets = [0, 32], sizes = [8, 32], strides = [1, 1]} : vector<8x96xf32> to vector<8x32xf32>
    %115 = arith.mulf %114, %72 : vector<8x32xf32>
    %116 = vector.extract_strided_slice %111 {offsets = [0, 0], sizes = [8, 32], strides = [1, 1]} : vector<8x96xf32> to vector<8x32xf32>
    %117 = arith.mulf %116, %113 : vector<8x32xf32>
    %118 = arith.addf %115, %117 : vector<8x32xf32>
    %119 = vector.extract_strided_slice %111 {offsets = [0, 64], sizes = [8, 32], strides = [1, 1]} : vector<8x96xf32> to vector<8x32xf32>
    %120 = math.tanh %118 : vector<8x32xf32>
    %121 = arith.mulf %119, %120 : vector<8x32xf32>
    %122 = arith.truncf %121 : vector<8x32xf32> to vector<8x32xbf16>
    %123 = tpu.concatenate %122, %98 in 1 : vector<8x32xbf16>, vector<8x32xbf16> -> vector<8x64xbf16>
    %cst_32 = arith.constant dense<0.000000e+00> : vector<8x128xf32>
    %124 = tpu.matmul %123, %1, %cst_32 {dimension_numbers = #tpu.dot_dimension_numbers<[1], [0], [0], [1], [0, 0, 1, 1], [], []>} : vector<8x64xbf16>, vector<64x128xbf16>, vector<8x128xf32> -> vector<8x128xf32>
    %125 = arith.addf %124, %4 : vector<8x128xf32>
    %126 = vector.extract_strided_slice %125 {offsets = [0, 0], sizes = [8, 96], strides = [1, 1]} : vector<8x128xf32> to vector<8x96xf32>
    %cst_33 = arith.constant 5.000000e-01 : f32
    %127 = vector.broadcast %cst_33 : f32 to vector<8x96xf32>
    %128 = arith.mulf %127, %126 : vector<8x96xf32>
    %129 = math.tanh %128 : vector<8x96xf32>
    %cst_34 = arith.constant 5.000000e-01 : f32
    %130 = vector.broadcast %cst_34 : f32 to vector<8x96xf32>
    %131 = arith.mulf %130, %129 : vector<8x96xf32>
    %cst_35 = arith.constant 5.000000e-01 : f32
    %132 = vector.broadcast %cst_35 : f32 to vector<8x96xf32>
    %133 = arith.addf %131, %132 : vector<8x96xf32>
    %134 = vector.extract_strided_slice %125 {offsets = [0, 96], sizes = [8, 32], strides = [1, 1]} : vector<8x128xf32> to vector<8x32xf32>
    %135 = math.tanh %134 : vector<8x32xf32>
    %136 = vector.extract_strided_slice %133 {offsets = [0, 32], sizes = [8, 32], strides = [1, 1]} : vector<8x96xf32> to vector<8x32xf32>
    %137 = arith.mulf %136, %94 : vector<8x32xf32>
    %138 = vector.extract_strided_slice %133 {offsets = [0, 0], sizes = [8, 32], strides = [1, 1]} : vector<8x96xf32> to vector<8x32xf32>
    %139 = arith.mulf %138, %135 : vector<8x32xf32>
    %140 = arith.addf %137, %139 : vector<8x32xf32>
    %141 = vector.extract_strided_slice %133 {offsets = [0, 64], sizes = [8, 32], strides = [1, 1]} : vector<8x96xf32> to vector<8x32xf32>
    %142 = math.tanh %140 : vector<8x32xf32>
    %143 = arith.mulf %141, %142 : vector<8x32xf32>
    %144 = arith.truncf %143 : vector<8x32xf32> to vector<8x32xbf16>
    %c3_i32 = arith.constant 3 : i32
    %145 = arith.index_cast %c3_i32 : i32 to index
    %c0_36 = arith.constant 0 : index
    %c0_37 = arith.constant 0 : index
    %146 = vector.load %arg1[%145, %c0_36, %c0_37] : memref<8x8x128xf32, #tpu.memory_space<vmem>>, vector<1x8x128xf32>
    %147 = vector.shape_cast %146 : vector<1x8x128xf32> to vector<8x128xf32>
    %cst_38 = arith.constant dense<0.000000e+00> : vector<8x128xf32>
    %148 = tpu.matmul %122, %0, %cst_38 {dimension_numbers = #tpu.dot_dimension_numbers<[1], [0], [0], [1], [0, 0, 1, 1], [], []>} : vector<8x32xbf16>, vector<32x128xbf16>, vector<8x128xf32> -> vector<8x128xf32>
    %149 = arith.addf %147, %148 : vector<8x128xf32>
    %150 = vector.extract_strided_slice %149 {offsets = [0, 0], sizes = [8, 96], strides = [1, 1]} : vector<8x128xf32> to vector<8x96xf32>
    %cst_39 = arith.constant 5.000000e-01 : f32
    %151 = vector.broadcast %cst_39 : f32 to vector<8x96xf32>
    %152 = arith.mulf %151, %150 : vector<8x96xf32>
    %153 = math.tanh %152 : vector<8x96xf32>
    %cst_40 = arith.constant 5.000000e-01 : f32
    %154 = vector.broadcast %cst_40 : f32 to vector<8x96xf32>
    %155 = arith.mulf %154, %153 : vector<8x96xf32>
    %cst_41 = arith.constant 5.000000e-01 : f32
    %156 = vector.broadcast %cst_41 : f32 to vector<8x96xf32>
    %157 = arith.addf %155, %156 : vector<8x96xf32>
    %158 = vector.extract_strided_slice %149 {offsets = [0, 96], sizes = [8, 32], strides = [1, 1]} : vector<8x128xf32> to vector<8x32xf32>
    %159 = math.tanh %158 : vector<8x32xf32>
    %160 = vector.extract_strided_slice %157 {offsets = [0, 32], sizes = [8, 32], strides = [1, 1]} : vector<8x96xf32> to vector<8x32xf32>
    %161 = arith.mulf %160, %118 : vector<8x32xf32>
    %162 = vector.extract_strided_slice %157 {offsets = [0, 0], sizes = [8, 32], strides = [1, 1]} : vector<8x96xf32> to vector<8x32xf32>
    %163 = arith.mulf %162, %159 : vector<8x32xf32>
    %164 = arith.addf %161, %163 : vector<8x32xf32>
    %165 = vector.extract_strided_slice %157 {offsets = [0, 64], sizes = [8, 32], strides = [1, 1]} : vector<8x96xf32> to vector<8x32xf32>
    %166 = math.tanh %164 : vector<8x32xf32>
    %167 = arith.mulf %165, %166 : vector<8x32xf32>
    %168 = arith.truncf %167 : vector<8x32xf32> to vector<8x32xbf16>
    %169 = tpu.concatenate %168, %144 in 1 : vector<8x32xbf16>, vector<8x32xbf16> -> vector<8x64xbf16>
    %cst_42 = arith.constant dense<0.000000e+00> : vector<8x128xf32>
    %170 = tpu.matmul %169, %1, %cst_42 {dimension_numbers = #tpu.dot_dimension_numbers<[1], [0], [0], [1], [0, 0, 1, 1], [], []>} : vector<8x64xbf16>, vector<64x128xbf16>, vector<8x128xf32> -> vector<8x128xf32>
    %171 = arith.addf %170, %4 : vector<8x128xf32>
    %172 = vector.extract_strided_slice %171 {offsets = [0, 0], sizes = [8, 96], strides = [1, 1]} : vector<8x128xf32> to vector<8x96xf32>
    %cst_43 = arith.constant 5.000000e-01 : f32
    %173 = vector.broadcast %cst_43 : f32 to vector<8x96xf32>
    %174 = arith.mulf %173, %172 : vector<8x96xf32>
    %175 = math.tanh %174 : vector<8x96xf32>
    %cst_44 = arith.constant 5.000000e-01 : f32
    %176 = vector.broadcast %cst_44 : f32 to vector<8x96xf32>
    %177 = arith.mulf %176, %175 : vector<8x96xf32>
    %cst_45 = arith.constant 5.000000e-01 : f32
    %178 = vector.broadcast %cst_45 : f32 to vector<8x96xf32>
    %179 = arith.addf %177, %178 : vector<8x96xf32>
    %180 = vector.extract_strided_slice %171 {offsets = [0, 96], sizes = [8, 32], strides = [1, 1]} : vector<8x128xf32> to vector<8x32xf32>
    %181 = math.tanh %180 : vector<8x32xf32>
    %182 = vector.extract_strided_slice %179 {offsets = [0, 32], sizes = [8, 32], strides = [1, 1]} : vector<8x96xf32> to vector<8x32xf32>
    %183 = arith.mulf %182, %140 : vector<8x32xf32>
    %184 = vector.extract_strided_slice %179 {offsets = [0, 0], sizes = [8, 32], strides = [1, 1]} : vector<8x96xf32> to vector<8x32xf32>
    %185 = arith.mulf %184, %181 : vector<8x32xf32>
    %186 = arith.addf %183, %185 : vector<8x32xf32>
    %187 = vector.extract_strided_slice %179 {offsets = [0, 64], sizes = [8, 32], strides = [1, 1]} : vector<8x96xf32> to vector<8x32xf32>
    %188 = math.tanh %186 : vector<8x32xf32>
    %189 = arith.mulf %187, %188 : vector<8x32xf32>
    %190 = arith.truncf %189 : vector<8x32xf32> to vector<8x32xbf16>
    %c4_i32 = arith.constant 4 : i32
    %191 = arith.index_cast %c4_i32 : i32 to index
    %c0_46 = arith.constant 0 : index
    %c0_47 = arith.constant 0 : index
    %192 = vector.load %arg1[%191, %c0_46, %c0_47] : memref<8x8x128xf32, #tpu.memory_space<vmem>>, vector<1x8x128xf32>
    %193 = vector.shape_cast %192 : vector<1x8x128xf32> to vector<8x128xf32>
    %cst_48 = arith.constant dense<0.000000e+00> : vector<8x128xf32>
    %194 = tpu.matmul %168, %0, %cst_48 {dimension_numbers = #tpu.dot_dimension_numbers<[1], [0], [0], [1], [0, 0, 1, 1], [], []>} : vector<8x32xbf16>, vector<32x128xbf16>, vector<8x128xf32> -> vector<8x128xf32>
    %195 = arith.addf %193, %194 : vector<8x128xf32>
    %196 = vector.extract_strided_slice %195 {offsets = [0, 0], sizes = [8, 96], strides = [1, 1]} : vector<8x128xf32> to vector<8x96xf32>
    %cst_49 = arith.constant 5.000000e-01 : f32
    %197 = vector.broadcast %cst_49 : f32 to vector<8x96xf32>
    %198 = arith.mulf %197, %196 : vector<8x96xf32>
    %199 = math.tanh %198 : vector<8x96xf32>
    %cst_50 = arith.constant 5.000000e-01 : f32
    %200 = vector.broadcast %cst_50 : f32 to vector<8x96xf32>
    %201 = arith.mulf %200, %199 : vector<8x96xf32>
    %cst_51 = arith.constant 5.000000e-01 : f32
    %202 = vector.broadcast %cst_51 : f32 to vector<8x96xf32>
    %203 = arith.addf %201, %202 : vector<8x96xf32>
    %204 = vector.extract_strided_slice %195 {offsets = [0, 96], sizes = [8, 32], strides = [1, 1]} : vector<8x128xf32> to vector<8x32xf32>
    %205 = math.tanh %204 : vector<8x32xf32>
    %206 = vector.extract_strided_slice %203 {offsets = [0, 32], sizes = [8, 32], strides = [1, 1]} : vector<8x96xf32> to vector<8x32xf32>
    %207 = arith.mulf %206, %164 : vector<8x32xf32>
    %208 = vector.extract_strided_slice %203 {offsets = [0, 0], sizes = [8, 32], strides = [1, 1]} : vector<8x96xf32> to vector<8x32xf32>
    %209 = arith.mulf %208, %205 : vector<8x32xf32>
    %210 = arith.addf %207, %209 : vector<8x32xf32>
    %211 = vector.extract_strided_slice %203 {offsets = [0, 64], sizes = [8, 32], strides = [1, 1]} : vector<8x96xf32> to vector<8x32xf32>
    %212 = math.tanh %210 : vector<8x32xf32>
    %213 = arith.mulf %211, %212 : vector<8x32xf32>
    %214 = arith.truncf %213 : vector<8x32xf32> to vector<8x32xbf16>
    %215 = tpu.concatenate %214, %190 in 1 : vector<8x32xbf16>, vector<8x32xbf16> -> vector<8x64xbf16>
    %cst_52 = arith.constant dense<0.000000e+00> : vector<8x128xf32>
    %216 = tpu.matmul %215, %1, %cst_52 {dimension_numbers = #tpu.dot_dimension_numbers<[1], [0], [0], [1], [0, 0, 1, 1], [], []>} : vector<8x64xbf16>, vector<64x128xbf16>, vector<8x128xf32> -> vector<8x128xf32>
    %217 = arith.addf %216, %4 : vector<8x128xf32>
    %218 = vector.extract_strided_slice %217 {offsets = [0, 0], sizes = [8, 96], strides = [1, 1]} : vector<8x128xf32> to vector<8x96xf32>
    %cst_53 = arith.constant 5.000000e-01 : f32
    %219 = vector.broadcast %cst_53 : f32 to vector<8x96xf32>
    %220 = arith.mulf %219, %218 : vector<8x96xf32>
    %221 = math.tanh %220 : vector<8x96xf32>
    %cst_54 = arith.constant 5.000000e-01 : f32
    %222 = vector.broadcast %cst_54 : f32 to vector<8x96xf32>
    %223 = arith.mulf %222, %221 : vector<8x96xf32>
    %cst_55 = arith.constant 5.000000e-01 : f32
    %224 = vector.broadcast %cst_55 : f32 to vector<8x96xf32>
    %225 = arith.addf %223, %224 : vector<8x96xf32>
    %226 = vector.extract_strided_slice %217 {offsets = [0, 96], sizes = [8, 32], strides = [1, 1]} : vector<8x128xf32> to vector<8x32xf32>
    %227 = math.tanh %226 : vector<8x32xf32>
    %228 = vector.extract_strided_slice %225 {offsets = [0, 32], sizes = [8, 32], strides = [1, 1]} : vector<8x96xf32> to vector<8x32xf32>
    %229 = arith.mulf %228, %186 : vector<8x32xf32>
    %230 = vector.extract_strided_slice %225 {offsets = [0, 0], sizes = [8, 32], strides = [1, 1]} : vector<8x96xf32> to vector<8x32xf32>
    %231 = arith.mulf %230, %227 : vector<8x32xf32>
    %232 = arith.addf %229, %231 : vector<8x32xf32>
    %233 = vector.extract_strided_slice %225 {offsets = [0, 64], sizes = [8, 32], strides = [1, 1]} : vector<8x96xf32> to vector<8x32xf32>
    %234 = math.tanh %232 : vector<8x32xf32>
    %235 = arith.mulf %233, %234 : vector<8x32xf32>
    %236 = arith.truncf %235 : vector<8x32xf32> to vector<8x32xbf16>
    %c5_i32 = arith.constant 5 : i32
    %237 = arith.index_cast %c5_i32 : i32 to index
    %c0_56 = arith.constant 0 : index
    %c0_57 = arith.constant 0 : index
    %238 = vector.load %arg1[%237, %c0_56, %c0_57] : memref<8x8x128xf32, #tpu.memory_space<vmem>>, vector<1x8x128xf32>
    %239 = vector.shape_cast %238 : vector<1x8x128xf32> to vector<8x128xf32>
    %cst_58 = arith.constant dense<0.000000e+00> : vector<8x128xf32>
    %240 = tpu.matmul %214, %0, %cst_58 {dimension_numbers = #tpu.dot_dimension_numbers<[1], [0], [0], [1], [0, 0, 1, 1], [], []>} : vector<8x32xbf16>, vector<32x128xbf16>, vector<8x128xf32> -> vector<8x128xf32>
    %241 = arith.addf %239, %240 : vector<8x128xf32>
    %242 = vector.extract_strided_slice %241 {offsets = [0, 0], sizes = [8, 96], strides = [1, 1]} : vector<8x128xf32> to vector<8x96xf32>
    %cst_59 = arith.constant 5.000000e-01 : f32
    %243 = vector.broadcast %cst_59 : f32 to vector<8x96xf32>
    %244 = arith.mulf %243, %242 : vector<8x96xf32>
    %245 = math.tanh %244 : vector<8x96xf32>
    %cst_60 = arith.constant 5.000000e-01 : f32
    %246 = vector.broadcast %cst_60 : f32 to vector<8x96xf32>
    %247 = arith.mulf %246, %245 : vector<8x96xf32>
    %cst_61 = arith.constant 5.000000e-01 : f32
    %248 = vector.broadcast %cst_61 : f32 to vector<8x96xf32>
    %249 = arith.addf %247, %248 : vector<8x96xf32>
    %250 = vector.extract_strided_slice %241 {offsets = [0, 96], sizes = [8, 32], strides = [1, 1]} : vector<8x128xf32> to vector<8x32xf32>
    %251 = math.tanh %250 : vector<8x32xf32>
    %252 = vector.extract_strided_slice %249 {offsets = [0, 32], sizes = [8, 32], strides = [1, 1]} : vector<8x96xf32> to vector<8x32xf32>
    %253 = arith.mulf %252, %210 : vector<8x32xf32>
    %254 = vector.extract_strided_slice %249 {offsets = [0, 0], sizes = [8, 32], strides = [1, 1]} : vector<8x96xf32> to vector<8x32xf32>
    %255 = arith.mulf %254, %251 : vector<8x32xf32>
    %256 = arith.addf %253, %255 : vector<8x32xf32>
    %257 = vector.extract_strided_slice %249 {offsets = [0, 64], sizes = [8, 32], strides = [1, 1]} : vector<8x96xf32> to vector<8x32xf32>
    %258 = math.tanh %256 : vector<8x32xf32>
    %259 = arith.mulf %257, %258 : vector<8x32xf32>
    %260 = arith.truncf %259 : vector<8x32xf32> to vector<8x32xbf16>
    %261 = tpu.concatenate %260, %236 in 1 : vector<8x32xbf16>, vector<8x32xbf16> -> vector<8x64xbf16>
    %cst_62 = arith.constant dense<0.000000e+00> : vector<8x128xf32>
    %262 = tpu.matmul %261, %1, %cst_62 {dimension_numbers = #tpu.dot_dimension_numbers<[1], [0], [0], [1], [0, 0, 1, 1], [], []>} : vector<8x64xbf16>, vector<64x128xbf16>, vector<8x128xf32> -> vector<8x128xf32>
    %263 = arith.addf %262, %4 : vector<8x128xf32>
    %264 = vector.extract_strided_slice %263 {offsets = [0, 0], sizes = [8, 96], strides = [1, 1]} : vector<8x128xf32> to vector<8x96xf32>
    %cst_63 = arith.constant 5.000000e-01 : f32
    %265 = vector.broadcast %cst_63 : f32 to vector<8x96xf32>
    %266 = arith.mulf %265, %264 : vector<8x96xf32>
    %267 = math.tanh %266 : vector<8x96xf32>
    %cst_64 = arith.constant 5.000000e-01 : f32
    %268 = vector.broadcast %cst_64 : f32 to vector<8x96xf32>
    %269 = arith.mulf %268, %267 : vector<8x96xf32>
    %cst_65 = arith.constant 5.000000e-01 : f32
    %270 = vector.broadcast %cst_65 : f32 to vector<8x96xf32>
    %271 = arith.addf %269, %270 : vector<8x96xf32>
    %272 = vector.extract_strided_slice %263 {offsets = [0, 96], sizes = [8, 32], strides = [1, 1]} : vector<8x128xf32> to vector<8x32xf32>
    %273 = math.tanh %272 : vector<8x32xf32>
    %274 = vector.extract_strided_slice %271 {offsets = [0, 32], sizes = [8, 32], strides = [1, 1]} : vector<8x96xf32> to vector<8x32xf32>
    %275 = arith.mulf %274, %232 : vector<8x32xf32>
    %276 = vector.extract_strided_slice %271 {offsets = [0, 0], sizes = [8, 32], strides = [1, 1]} : vector<8x96xf32> to vector<8x32xf32>
    %277 = arith.mulf %276, %273 : vector<8x32xf32>
    %278 = arith.addf %275, %277 : vector<8x32xf32>
    %279 = vector.extract_strided_slice %271 {offsets = [0, 64], sizes = [8, 32], strides = [1, 1]} : vector<8x96xf32> to vector<8x32xf32>
    %280 = math.tanh %278 : vector<8x32xf32>
    %281 = arith.mulf %279, %280 : vector<8x32xf32>
    %282 = arith.truncf %281 : vector<8x32xf32> to vector<8x32xbf16>
    %c6_i32 = arith.constant 6 : i32
    %283 = arith.index_cast %c6_i32 : i32 to index
    %c0_66 = arith.constant 0 : index
    %c0_67 = arith.constant 0 : index
    %284 = vector.load %arg1[%283, %c0_66, %c0_67] : memref<8x8x128xf32, #tpu.memory_space<vmem>>, vector<1x8x128xf32>
    %285 = vector.shape_cast %284 : vector<1x8x128xf32> to vector<8x128xf32>
    %cst_68 = arith.constant dense<0.000000e+00> : vector<8x128xf32>
    %286 = tpu.matmul %260, %0, %cst_68 {dimension_numbers = #tpu.dot_dimension_numbers<[1], [0], [0], [1], [0, 0, 1, 1], [], []>} : vector<8x32xbf16>, vector<32x128xbf16>, vector<8x128xf32> -> vector<8x128xf32>
    %287 = arith.addf %285, %286 : vector<8x128xf32>
    %288 = vector.extract_strided_slice %287 {offsets = [0, 0], sizes = [8, 96], strides = [1, 1]} : vector<8x128xf32> to vector<8x96xf32>
    %cst_69 = arith.constant 5.000000e-01 : f32
    %289 = vector.broadcast %cst_69 : f32 to vector<8x96xf32>
    %290 = arith.mulf %289, %288 : vector<8x96xf32>
    %291 = math.tanh %290 : vector<8x96xf32>
    %cst_70 = arith.constant 5.000000e-01 : f32
    %292 = vector.broadcast %cst_70 : f32 to vector<8x96xf32>
    %293 = arith.mulf %292, %291 : vector<8x96xf32>
    %cst_71 = arith.constant 5.000000e-01 : f32
    %294 = vector.broadcast %cst_71 : f32 to vector<8x96xf32>
    %295 = arith.addf %293, %294 : vector<8x96xf32>
    %296 = vector.extract_strided_slice %287 {offsets = [0, 96], sizes = [8, 32], strides = [1, 1]} : vector<8x128xf32> to vector<8x32xf32>
    %297 = math.tanh %296 : vector<8x32xf32>
    %298 = vector.extract_strided_slice %295 {offsets = [0, 32], sizes = [8, 32], strides = [1, 1]} : vector<8x96xf32> to vector<8x32xf32>
    %299 = arith.mulf %298, %256 : vector<8x32xf32>
    %300 = vector.extract_strided_slice %295 {offsets = [0, 0], sizes = [8, 32], strides = [1, 1]} : vector<8x96xf32> to vector<8x32xf32>
    %301 = arith.mulf %300, %297 : vector<8x32xf32>
    %302 = arith.addf %299, %301 : vector<8x32xf32>
    %303 = vector.extract_strided_slice %295 {offsets = [0, 64], sizes = [8, 32], strides = [1, 1]} : vector<8x96xf32> to vector<8x32xf32>
    %304 = math.tanh %302 : vector<8x32xf32>
    %305 = arith.mulf %303, %304 : vector<8x32xf32>
    %306 = arith.truncf %305 : vector<8x32xf32> to vector<8x32xbf16>
    %307 = tpu.concatenate %306, %282 in 1 : vector<8x32xbf16>, vector<8x32xbf16> -> vector<8x64xbf16>
    %cst_72 = arith.constant dense<0.000000e+00> : vector<8x128xf32>
    %308 = tpu.matmul %307, %1, %cst_72 {dimension_numbers = #tpu.dot_dimension_numbers<[1], [0], [0], [1], [0, 0, 1, 1], [], []>} : vector<8x64xbf16>, vector<64x128xbf16>, vector<8x128xf32> -> vector<8x128xf32>
    %309 = arith.addf %308, %4 : vector<8x128xf32>
    %310 = vector.extract_strided_slice %309 {offsets = [0, 0], sizes = [8, 96], strides = [1, 1]} : vector<8x128xf32> to vector<8x96xf32>
    %cst_73 = arith.constant 5.000000e-01 : f32
    %311 = vector.broadcast %cst_73 : f32 to vector<8x96xf32>
    %312 = arith.mulf %311, %310 : vector<8x96xf32>
    %313 = math.tanh %312 : vector<8x96xf32>
    %cst_74 = arith.constant 5.000000e-01 : f32
    %314 = vector.broadcast %cst_74 : f32 to vector<8x96xf32>
    %315 = arith.mulf %314, %313 : vector<8x96xf32>
    %cst_75 = arith.constant 5.000000e-01 : f32
    %316 = vector.broadcast %cst_75 : f32 to vector<8x96xf32>
    %317 = arith.addf %315, %316 : vector<8x96xf32>
    %318 = vector.extract_strided_slice %309 {offsets = [0, 96], sizes = [8, 32], strides = [1, 1]} : vector<8x128xf32> to vector<8x32xf32>
    %319 = math.tanh %318 : vector<8x32xf32>
    %320 = vector.extract_strided_slice %317 {offsets = [0, 32], sizes = [8, 32], strides = [1, 1]} : vector<8x96xf32> to vector<8x32xf32>
    %321 = arith.mulf %320, %278 : vector<8x32xf32>
    %322 = vector.extract_strided_slice %317 {offsets = [0, 0], sizes = [8, 32], strides = [1, 1]} : vector<8x96xf32> to vector<8x32xf32>
    %323 = arith.mulf %322, %319 : vector<8x32xf32>
    %324 = arith.addf %321, %323 : vector<8x32xf32>
    %325 = vector.extract_strided_slice %317 {offsets = [0, 64], sizes = [8, 32], strides = [1, 1]} : vector<8x96xf32> to vector<8x32xf32>
    %326 = math.tanh %324 : vector<8x32xf32>
    %327 = arith.mulf %325, %326 : vector<8x32xf32>
    %328 = arith.truncf %327 : vector<8x32xf32> to vector<8x32xbf16>
    %c7_i32 = arith.constant 7 : i32
    %329 = arith.index_cast %c7_i32 : i32 to index
    %c0_76 = arith.constant 0 : index
    %c0_77 = arith.constant 0 : index
    %330 = vector.load %arg1[%329, %c0_76, %c0_77] : memref<8x8x128xf32, #tpu.memory_space<vmem>>, vector<1x8x128xf32>
    %331 = vector.shape_cast %330 : vector<1x8x128xf32> to vector<8x128xf32>
    %cst_78 = arith.constant dense<0.000000e+00> : vector<8x128xf32>
    %332 = tpu.matmul %306, %0, %cst_78 {dimension_numbers = #tpu.dot_dimension_numbers<[1], [0], [0], [1], [0, 0, 1, 1], [], []>} : vector<8x32xbf16>, vector<32x128xbf16>, vector<8x128xf32> -> vector<8x128xf32>
    %333 = arith.addf %331, %332 : vector<8x128xf32>
    %334 = vector.extract_strided_slice %333 {offsets = [0, 0], sizes = [8, 96], strides = [1, 1]} : vector<8x128xf32> to vector<8x96xf32>
    %cst_79 = arith.constant 5.000000e-01 : f32
    %335 = vector.broadcast %cst_79 : f32 to vector<8x96xf32>
    %336 = arith.mulf %335, %334 : vector<8x96xf32>
    %337 = math.tanh %336 : vector<8x96xf32>
    %cst_80 = arith.constant 5.000000e-01 : f32
    %338 = vector.broadcast %cst_80 : f32 to vector<8x96xf32>
    %339 = arith.mulf %338, %337 : vector<8x96xf32>
    %cst_81 = arith.constant 5.000000e-01 : f32
    %340 = vector.broadcast %cst_81 : f32 to vector<8x96xf32>
    %341 = arith.addf %339, %340 : vector<8x96xf32>
    %342 = vector.extract_strided_slice %333 {offsets = [0, 96], sizes = [8, 32], strides = [1, 1]} : vector<8x128xf32> to vector<8x32xf32>
    %343 = math.tanh %342 : vector<8x32xf32>
    %344 = vector.extract_strided_slice %341 {offsets = [0, 32], sizes = [8, 32], strides = [1, 1]} : vector<8x96xf32> to vector<8x32xf32>
    %345 = arith.mulf %344, %302 : vector<8x32xf32>
    %346 = vector.extract_strided_slice %341 {offsets = [0, 0], sizes = [8, 32], strides = [1, 1]} : vector<8x96xf32> to vector<8x32xf32>
    %347 = arith.mulf %346, %343 : vector<8x32xf32>
    %348 = arith.addf %345, %347 : vector<8x32xf32>
    %349 = vector.extract_strided_slice %341 {offsets = [0, 64], sizes = [8, 32], strides = [1, 1]} : vector<8x96xf32> to vector<8x32xf32>
    %350 = math.tanh %348 : vector<8x32xf32>
    %351 = arith.mulf %349, %350 : vector<8x32xf32>
    %352 = arith.truncf %351 : vector<8x32xf32> to vector<8x32xbf16>
    %353 = tpu.concatenate %352, %328 in 1 : vector<8x32xbf16>, vector<8x32xbf16> -> vector<8x64xbf16>
    %cst_82 = arith.constant dense<0.000000e+00> : vector<8x128xf32>
    %354 = tpu.matmul %353, %1, %cst_82 {dimension_numbers = #tpu.dot_dimension_numbers<[1], [0], [0], [1], [0, 0, 1, 1], [], []>} : vector<8x64xbf16>, vector<64x128xbf16>, vector<8x128xf32> -> vector<8x128xf32>
    %355 = arith.addf %354, %4 : vector<8x128xf32>
    %356 = vector.extract_strided_slice %355 {offsets = [0, 0], sizes = [8, 96], strides = [1, 1]} : vector<8x128xf32> to vector<8x96xf32>
    %cst_83 = arith.constant 5.000000e-01 : f32
    %357 = vector.broadcast %cst_83 : f32 to vector<8x96xf32>
    %358 = arith.mulf %357, %356 : vector<8x96xf32>
    %359 = math.tanh %358 : vector<8x96xf32>
    %cst_84 = arith.constant 5.000000e-01 : f32
    %360 = vector.broadcast %cst_84 : f32 to vector<8x96xf32>
    %361 = arith.mulf %360, %359 : vector<8x96xf32>
    %cst_85 = arith.constant 5.000000e-01 : f32
    %362 = vector.broadcast %cst_85 : f32 to vector<8x96xf32>
    %363 = arith.addf %361, %362 : vector<8x96xf32>
    %364 = vector.extract_strided_slice %355 {offsets = [0, 96], sizes = [8, 32], strides = [1, 1]} : vector<8x128xf32> to vector<8x32xf32>
    %365 = math.tanh %364 : vector<8x32xf32>
    %366 = vector.extract_strided_slice %363 {offsets = [0, 32], sizes = [8, 32], strides = [1, 1]} : vector<8x96xf32> to vector<8x32xf32>
    %367 = arith.mulf %366, %324 : vector<8x32xf32>
    %368 = vector.extract_strided_slice %363 {offsets = [0, 0], sizes = [8, 32], strides = [1, 1]} : vector<8x96xf32> to vector<8x32xf32>
    %369 = arith.mulf %368, %365 : vector<8x32xf32>
    %370 = arith.addf %367, %369 : vector<8x32xf32>
    %371 = vector.extract_strided_slice %363 {offsets = [0, 64], sizes = [8, 32], strides = [1, 1]} : vector<8x96xf32> to vector<8x32xf32>
    %372 = math.tanh %370 : vector<8x32xf32>
    %373 = arith.mulf %371, %372 : vector<8x32xf32>
    %374 = arith.truncf %373 : vector<8x32xf32> to vector<8x32xbf16>
    %c8_i32 = arith.constant 8 : i32
    %c0_86 = arith.constant 0 : index
    %c0_87 = arith.constant 0 : index
    %375 = vector.load %arg5[%c0_86, %c0_87] : memref<32x128xbf16, #tpu.memory_space<vmem>>, vector<32x128xbf16>
    %cst_88 = arith.constant dense<0.000000e+00> : vector<8x128xf32>
    %376 = tpu.matmul %374, %375, %cst_88 {dimension_numbers = #tpu.dot_dimension_numbers<[1], [0], [0], [1], [0, 0, 1, 1], [], []>} : vector<8x32xbf16>, vector<32x128xbf16>, vector<8x128xf32> -> vector<8x128xf32>
    %c0_89 = arith.constant 0 : index
    %c0_90 = arith.constant 0 : index
    %377 = vector.load %arg6[%c0_89, %c0_90] : memref<1x128xf32, #tpu.memory_space<vmem>>, vector<1x128xf32>
    %378 = vector.broadcast %377 : vector<1x128xf32> to vector<8x128xf32>
    %379 = arith.addf %376, %378 : vector<8x128xf32>
    %c0_91 = arith.constant 0 : index
    %c0_92 = arith.constant 0 : index
    %380 = vector.load %arg7[%c0_91, %c0_92] : memref<8x128xf32, #tpu.memory_space<vmem>>, vector<8x128xf32>
    tpu.vector_store %arg7[%c0_91, %c0_92], %379 {strides = array<i32>} : memref<8x128xf32, #tpu.memory_space<vmem>>, vector<8x128xf32>,
    return
  }
  func.func @transform_0(%arg0: i32) -> (i32, i32, i32) {
    %c0_i32 = arith.constant 0 : i32
    %c0_i32_0 = arith.constant 0 : i32
    %c0_i32_1 = arith.constant 0 : i32
    return %c0_i32, %arg0, %c0_i32_0 : i32, i32, i32
  }
  func.func @transform_1(%arg0: i32) -> (i32, i32) {
    %c0_i32 = arith.constant 0 : i32
    %c0_i32_0 = arith.constant 0 : i32
    %c0_i32_1 = arith.constant 0 : i32
    return %c0_i32, %c0_i32_0 : i32, i32
  }
  func.func @transform_2(%arg0: i32) -> (i32, i32) {
    %c0_i32 = arith.constant 0 : i32
    %c0_i32_0 = arith.constant 0 : i32
    %c0_i32_1 = arith.constant 0 : i32
    return %c0_i32, %c0_i32_0 : i32, i32
  }
  func.func @transform_3(%arg0: i32) -> (i32, i32) {
    %c0_i32 = arith.constant 0 : i32
    %c0_i32_0 = arith.constant 0 : i32
    %c0_i32_1 = arith.constant 0 : i32
    return %c0_i32, %c0_i32_0 : i32, i32
  }
  func.func @transform_4(%arg0: i32) -> (i32, i32) {
    %c0_i32 = arith.constant 0 : i32
    %c0_i32_0 = arith.constant 0 : i32
    %c0_i32_1 = arith.constant 0 : i32
    return %c0_i32, %c0_i32_0 : i32, i32
  }
  func.func @transform_5(%arg0: i32) -> (i32, i32) {
    %c0_i32 = arith.constant 0 : i32
    %c0_i32_0 = arith.constant 0 : i32
    %c0_i32_1 = arith.constant 0 : i32
    return %c0_i32, %c0_i32_0 : i32, i32
  }
  func.func @transform_6(%arg0: i32) -> (i32, i32) {
    %c0_i32 = arith.constant 0 : i32
    %c0_i32_0 = arith.constant 0 : i32
    return %arg0, %c0_i32 : i32, i32
  }
}

</mosaic_0001>

<llo_original>
// kernel: _lambda_.1
$region0: #{_lambda_.1}
  #allocation0 [shape = 'u32[]', space=smem, size = 0x4, offset = 0x4, fixed_abs, tag = 'smem constant byte address 0x4 - core index']
  #allocation1 [shape = 'u32[144,128]{1,0:T(1,128)}', space=vmem, size = 0x12000, scoped, tag = 'internal scratch']
  %s0 = inlined_call_operand.vmem [shape: f32[8,8,128], index: 0, kind: input, shape index: {}]
  %s1 = inlined_call_operand.vmem [shape: bf16[32,128], index: 1, kind: input, shape index: {}]
  %s2 = inlined_call_operand.vmem [shape: bf16[64,128], index: 2, kind: input, shape index: {}]
  %s3 = inlined_call_operand.vmem [shape: f32[1,128], index: 3, kind: input, shape index: {}]
  %s4 = inlined_call_operand.vmem [shape: bf16[32,128], index: 4, kind: input, shape index: {}]
  %s5 = inlined_call_operand.vmem [shape: f32[1,128], index: 5, kind: input, shape index: {}]
  %s6 = inlined_call_operand.vmem [shape: f32[8,128], index: 6, kind: output, shape index: {}]
  %s7 = sld [smem:[#allocation0]]
  $region34: #{_lambda_.1} parent=0
    _
  %s9 = ssub.s32 1, %s7
  %s10 = scalar_select 0, %s9, %s7
  // Predicated region
  $region2: #{_lambda_.1} parent=0 // pred_check
    _
  $region3: #{_lambda_.1} parent=0 // pred_check_branch
    %12 = sbr.rel (0) target = $region5
  $region4: #{_lambda_.1} parent=0 // pred_region
    _
  $region5: #{_lambda_.1} parent=0 // pred_fallthru
    _
  // Predicated region
  $region6: #{_lambda_.1} parent=0 // pred_check
    _
  $region7: #{_lambda_.1} parent=0 // pred_check_branch
    %14 = sbr.rel (0) target = $region9
  $region8: #{_lambda_.1} parent=0 // pred_region
    _
  $region9: #{_lambda_.1} parent=0 // pred_fallthru
    _
  // Predicated region
  $region10: #{_lambda_.1} parent=0 // pred_check
    _
  $region11: #{_lambda_.1} parent=0 // pred_check_branch
    %16 = sbr.rel (0) target = $region13
  $region12: #{_lambda_.1} parent=0 // pred_region
    _
  $region13: #{_lambda_.1} parent=0 // pred_fallthru
    _
  // Predicated region
  $region14: #{_lambda_.1} parent=0 // pred_check
    _
  $region15: #{_lambda_.1} parent=0 // pred_check_branch
    %18 = sbr.rel (0) target = $region17
  $region16: #{_lambda_.1} parent=0 // pred_region
    _
  $region17: #{_lambda_.1} parent=0 // pred_fallthru
    _
  // Predicated region
  $region18: #{_lambda_.1} parent=0 // pred_check
    _
  $region19: #{_lambda_.1} parent=0 // pred_check_branch
    %20 = sbr.rel (0) target = $region21
  $region20: #{_lambda_.1} parent=0 // pred_region
    _
  $region21: #{_lambda_.1} parent=0 // pred_fallthru
    _
  // Predicated region
  $region22: #{_lambda_.1} parent=0 // pred_check
    _
  $region23: #{_lambda_.1} parent=0 // pred_check_branch
    %22 = sbr.rel (0) target = $region25
  $region24: #{_lambda_.1} parent=0 // pred_region
    _
  $region25: #{_lambda_.1} parent=0 // pred_fallthru
    _
  %v24 = vld [vmem:[%s1] sm:$0xf]
  %v25 = vld [vmem:[%s1 + $0x4] sm:$0xf]
  %v26 = vld [vmem:[%s1 + $0x8] sm:$0xf]
  %v27 = vld [vmem:[%s1 + $0xc] sm:$0xf]
  %v28 = vld [vmem:[%s2] sm:$0xf]
  %v29 = vld [vmem:[%s2 + $0x4] sm:$0xf]
  %v30 = vld [vmem:[%s2 + $0x8] sm:$0xf]
  %v31 = vld [vmem:[%s2 + $0xc] sm:$0xf]
  %v32 = vld [vmem:[%s2 + $0x10] sm:$0xf]
  %v33 = vld [vmem:[%s2 + $0x14] sm:$0xf]
  %v34 = vld [vmem:[%s2 + $0x18] sm:$0xf]
  %v35 = vld [vmem:[%s2 + $0x1c] sm:$0xf]
  %v36 = vld [vmem:[%s3] sm:$0x1]
  %v38 = vlaneseq
  %v39 = vshrl.u32 %v38, 7
  %v40 = vsub.s32 0, %v39
  %v41 = vrot.slane %v36, %v40
  %v43 = vld [vmem:[%s0] sm:$0xff]
  %v48 = vunpack.c.l.b16 %v24
  %v49 = vunpack.c.l.b16 %v25
  %v50 = vunpack.c.l.b16 %v26
  %v51 = vunpack.c.l.b16 %v27
  %v52 = vpack.c.b16 %v49, %v48
  %v53 = vpack.c.b16 %v51, %v50
  %vm56 = vcmask 261120
  %v58 = vsel %vm56, 0, 0
  %60 = vmatprep.subr.bf16.mxu0 0
  %61 = vmatpush1.bf16.msra.mxu0 %v52
  %62 = vmatprep.subr.bf16.mxu0 0
  %63 = vmatpush1.bf16.msra.mxu0 %v53
  %64 = vmatprep.subr.bf16.mxu0 0
  %65 = vmatpush1.bf16.msra.mxu0 0
  %66 = vmatprep.subr.bf16.mxu0 0
  %67 = vmatpush1.bf16.msra.mxu0 0
  %68 = vmatprep.subr.bf16.mxu0 0
  %69 = vmatpush1.bf16.msra.mxu0 0
  %70 = vmatprep.subr.bf16.mxu0 0
  %71 = vmatpush1.bf16.msra.mxu0 0
  %72 = vmatprep.subr.bf16.mxu0 0
  %73 = vmatpush1.bf16.msra.mxu0 0
  %74 = vmatprep.subr.bf16.mxu0 0
  %75 = vmatpush1.bf16.msra.mxu0 0
  %76 = vmatprep.subr.bf16.mxu0 0
  %77 = vmatpush1.bf16.msra.mxu0 0
  %78 = vmatprep.subr.bf16.mxu0 0
  %79 = vmatpush1.bf16.msra.mxu0 0
  %80 = vmatprep.subr.bf16.mxu0 0
  %81 = vmatpush1.bf16.msra.mxu0 0
  %82 = vmatprep.subr.bf16.mxu0 0
  %83 = vmatpush1.bf16.msra.mxu0 0
  %84 = vmatprep.subr.bf16.mxu0 0
  %85 = vmatpush1.bf16.msra.mxu0 0
  %86 = vmatprep.subr.bf16.mxu0 0
  %87 = vmatpush1.bf16.msra.mxu0 0
  %88 = vmatprep.subr.bf16.mxu0 0
  %89 = vmatpush1.bf16.msra.mxu0 0
  %90 = vmatprep.subr.bf16.mxu0 0
  %91 = vmatpush1.bf16.msra.mxu0 0
  %92 = vmatprep.mubr.bf16.mxu0 0
  %93 = vmatmul.mubr.bf16.gmra.mrb[0].mxu0 %v58
  %v94 = vpop.f32.mrb[0].mxu0
  %v95 = vadd.f32 0.0, %v94
  %v96 = vpop.f32.mrb[0].mxu0
  %v97 = vpop.f32.mrb[0].mxu0
  %v98 = vpop.f32.mrb[0].mxu0
  %99 = vdwg.mxu0
  %v100 = vadd.f32 %v43, %v95
  %v101 = vmul.f32 %v100, 0.5
  %v102 = vtanh.pop %v101
  %v103 = vmul.f32 %v102, 0.5
  %v104 = vadd.f32 %v103, 0.5
  %v105 = vtanh.pop %v100
  %v106 = vmul.f32 %v104, 0.0
  %108 = vrot.lane.b32.xlu0 %v105, 32
  %v109 = vpop.permute.xlu0 %108
  %v111 = vmul.f32 %v104, %v109
  %113 = vrot.lane.b32.xlu0 %v111, 32
  %v114 = vpop.permute.xlu0 %113
  %v116 = vadd.f32 %v106, %v114
  %v117 = vtanh.pop %v116
  %119 = vrot.lane.b32.xlu0 %v117, 32
  %v120 = vpop.permute.xlu0 %119
  %v122 = vmul.f32 %v104, %v120
  %v123 = vpack.c.bf16 %v122, %v122
  %125 = vrot.lane.b32.xlu0 %v123, 64
  %v126 = vpop.permute.xlu0 %125
  %v128 = vsel %vm56, %v126, 0
  %v137 = vunpack.c.l.b16 %v28
  %v138 = vunpack.c.l.b16 %v29
  %v139 = vunpack.c.l.b16 %v30
  %v140 = vunpack.c.l.b16 %v31
  %v141 = vunpack.c.l.b16 %v32
  %v142 = vunpack.c.l.b16 %v33
  %v143 = vunpack.c.l.b16 %v34
  %v144 = vunpack.c.l.b16 %v35
  %v145 = vpack.c.b16 %v138, %v137
  %v146 = vpack.c.b16 %v140, %v139
  %v147 = vpack.c.b16 %v142, %v141
  %v148 = vpack.c.b16 %v144, %v143
  %vm153 = vcmask 523264
  %v154 = vsel %vm153, %v128, 0
  %156 = vmatprep.subr.bf16.mxu0 0
  %157 = vmatpush1.bf16.msra.mxu0 %v145
  %158 = vmatprep.subr.bf16.mxu0 0
  %159 = vmatpush1.bf16.msra.mxu0 %v146
  %160 = vmatprep.subr.bf16.mxu0 0
  %161 = vmatpush1.bf16.msra.mxu0 %v147
  %162 = vmatprep.subr.bf16.mxu0 0
  %163 = vmatpush1.bf16.msra.mxu0 %v148
  %164 = vmatprep.subr.bf16.mxu0 0
  %165 = vmatpush1.bf16.msra.mxu0 0
  %166 = vmatprep.subr.bf16.mxu0 0
  %167 = vmatpush1.bf16.msra.mxu0 0
  %168 = vmatprep.subr.bf16.mxu0 0
  %169 = vmatpush1.bf16.msra.mxu0 0
  %170 = vmatprep.subr.bf16.mxu0 0
  %171 = vmatpush1.bf16.msra.mxu0 0
  %172 = vmatprep.subr.bf16.mxu0 0
  %173 = vmatpush1.bf16.msra.mxu0 0
  %174 = vmatprep.subr.bf16.mxu0 0
  %175 = vmatpush1.bf16.msra.mxu0 0
  %176 = vmatprep.subr.bf16.mxu0 0
  %177 = vmatpush1.bf16.msra.mxu0 0
  %178 = vmatprep.subr.bf16.mxu0 0
  %179 = vmatpush1.bf16.msra.mxu0 0
  %180 = vmatprep.subr.bf16.mxu0 0
  %181 = vmatpush1.bf16.msra.mxu0 0
  %182 = vmatprep.subr.bf16.mxu0 0
  %183 = vmatpush1.bf16.msra.mxu0 0
  %184 = vmatprep.subr.bf16.mxu0 0
  %185 = vmatpush1.bf16.msra.mxu0 0
  %186 = vmatprep.subr.bf16.mxu0 0
  %187 = vmatpush1.bf16.msra.mxu0 0
  %188 = vmatprep.mubr.bf16.mxu0 0
  %189 = vmatmul.mubr.bf16.gmra.mrb[0].mxu0 %v154
  %v190 = vpop.f32.mrb[0].mxu0
  %v191 = vadd.f32 %v41, %v190
  %v192 = vpop.f32.mrb[0].mxu0
  %v193 = vpop.f32.mrb[0].mxu0
  %v194 = vpop.f32.mrb[0].mxu0
  %195 = vdwg.mxu0
  %v196 = vmul.f32 %v191, 0.5
  %v197 = vtanh.pop %v196
  %v198 = vmul.f32 %v197, 0.5
  %v199 = vadd.f32 %v198, 0.5
  %v200 = vtanh.pop %v191
  %v201 = vmul.f32 %v199, 0.0
  %203 = vrot.lane.b32.xlu0 %v200, 32
  %v204 = vpop.permute.xlu0 %203
  %v206 = vmul.f32 %v199, %v204
  %208 = vrot.lane.b32.xlu0 %v206, 32
  %v209 = vpop.permute.xlu0 %208
  %v211 = vadd.f32 %v201, %v209
  %v212 = vtanh.pop %v211
  %214 = vrot.lane.b32.xlu0 %v212, 32
  %v215 = vpop.permute.xlu0 %214
  %v217 = vmul.f32 %v199, %v215
  %v218 = vpack.c.bf16 %v217, %v217
  %s219 = scalar_lea.vmem %s0, 8
  %v220 = vld [vmem:[%s219] sm:$0xff]
  %v221 = vsel %vm56, %v126, 0
  %223 = vmatprep.subr.bf16.mxu0 0
  %224 = vmatpush1.bf16.msra.mxu0 %v52
  %225 = vmatprep.subr.bf16.mxu0 0
  %226 = vmatpush1.bf16.msra.mxu0 %v53
  %227 = vmatprep.subr.bf16.mxu0 0
  %228 = vmatpush1.bf16.msra.mxu0 0
  %229 = vmatprep.subr.bf16.mxu0 0
  %230 = vmatpush1.bf16.msra.mxu0 0
  %231 = vmatprep.subr.bf16.mxu0 0
  %232 = vmatpush1.bf16.msra.mxu0 0
  %233 = vmatprep.subr.bf16.mxu0 0
  %234 = vmatpush1.bf16.msra.mxu0 0
  %235 = vmatprep.subr.bf16.mxu0 0
  %236 = vmatpush1.bf16.msra.mxu0 0
  %237 = vmatprep.subr.bf16.mxu0 0
  %238 = vmatpush1.bf16.msra.mxu0 0
  %239 = vmatprep.subr.bf16.mxu0 0
  %240 = vmatpush1.bf16.msra.mxu0 0
  %241 = vmatprep.subr.bf16.mxu0 0
  %242 = vmatpush1.bf16.msra.mxu0 0
  %243 = vmatprep.subr.bf16.mxu0 0
  %244 = vmatpush1.bf16.msra.mxu0 0
  %245 = vmatprep.subr.bf16.mxu0 0
  %246 = vmatpush1.bf16.msra.mxu0 0
  %247 = vmatprep.subr.bf16.mxu0 0
  %248 = vmatpush1.bf16.msra.mxu0 0
  %249 = vmatprep.subr.bf16.mxu0 0
  %250 = vmatpush1.bf16.msra.mxu0 0
  %251 = vmatprep.subr.bf16.mxu0 0
  %252 = vmatpush1.bf16.msra.mxu0 0
  %253 = vmatprep.subr.bf16.mxu0 0
  %254 = vmatpush1.bf16.msra.mxu0 0
  %255 = vmatprep.mubr.bf16.mxu0 0
  %256 = vmatmul.mubr.bf16.gmra.mrb[0].mxu0 %v221
  %v257 = vpop.f32.mrb[0].mxu0
  %v258 = vadd.f32 0.0, %v257
  %v259 = vpop.f32.mrb[0].mxu0
  %v260 = vpop.f32.mrb[0].mxu0
  %v261 = vpop.f32.mrb[0].mxu0
  %262 = vdwg.mxu0
  %v263 = vadd.f32 %v220, %v258
  %v264 = vmul.f32 %v263, 0.5
  %v265 = vtanh.pop %v264
  %v266 = vmul.f32 %v265, 0.5
  %v267 = vadd.f32 %v266, 0.5
  %v268 = vtanh.pop %v263
  %v269 = vmul.f32 %v267, %v116
  %271 = vrot.lane.b32.xlu0 %v268, 32
  %v272 = vpop.permute.xlu0 %271
  %v274 = vmul.f32 %v267, %v272
  %276 = vrot.lane.b32.xlu0 %v274, 32
  %v277 = vpop.permute.xlu0 %276
  %v279 = vadd.f32 %v269, %v277
  %v280 = vtanh.pop %v279
  %282 = vrot.lane.b32.xlu0 %v280, 32
  %v283 = vpop.permute.xlu0 %282
  %v285 = vmul.f32 %v267, %v283
  %v286 = vpack.c.bf16 %v285, %v285
  %288 = vrot.lane.b32.xlu0 %v286, 64
  %v289 = vpop.permute.xlu0 %288
  %291 = vrot.lane.b32.xlu0 %v218, 96
  %v292 = vpop.permute.xlu0 %291
  %v295 = vsel %vm56, %v289, %v292
  %v296 = vsel %vm153, %v295, 0
  %298 = vmatprep.subr.bf16.mxu0 0
  %299 = vmatpush1.bf16.msra.mxu0 %v145
  %300 = vmatprep.subr.bf16.mxu0 0
  %301 = vmatpush1.bf16.msra.mxu0 %v146
  %302 = vmatprep.subr.bf16.mxu0 0
  %303 = vmatpush1.bf16.msra.mxu0 %v147
  %304 = vmatprep.subr.bf16.mxu0 0
  %305 = vmatpush1.bf16.msra.mxu0 %v148
  %306 = vmatprep.subr.bf16.mxu0 0
  %307 = vmatpush1.bf16.msra.mxu0 0
  %308 = vmatprep.subr.bf16.mxu0 0
  %309 = vmatpush1.bf16.msra.mxu0 0
  %310 = vmatprep.subr.bf16.mxu0 0
  %311 = vmatpush1.bf16.msra.mxu0 0
  %312 = vmatprep.subr.bf16.mxu0 0
  %313 = vmatpush1.bf16.msra.mxu0 0
  %314 = vmatprep.subr.bf16.mxu0 0
  %315 = vmatpush1.bf16.msra.mxu0 0
  %316 = vmatprep.subr.bf16.mxu0 0
  %317 = vmatpush1.bf16.msra.mxu0 0
  %318 = vmatprep.subr.bf16.mxu0 0
  %319 = vmatpush1.bf16.msra.mxu0 0
  %320 = vmatprep.subr.bf16.mxu0 0
  %321 = vmatpush1.bf16.msra.mxu0 0
  %322 = vmatprep.subr.bf16.mxu0 0
  %323 = vmatpush1.bf16.msra.mxu0 0
  %324 = vmatprep.subr.bf16.mxu0 0
  %325 = vmatpush1.bf16.msra.mxu0 0
  %326 = vmatprep.subr.bf16.mxu0 0
  %327 = vmatpush1.bf16.msra.mxu0 0
  %328 = vmatprep.subr.bf16.mxu0 0
  %329 = vmatpush1.bf16.msra.mxu0 0
  %330 = vmatprep.mubr.bf16.mxu0 0
  %331 = vmatmul.mubr.bf16.gmra.mrb[0].mxu0 %v296
  %v332 = vpop.f32.mrb[0].mxu0
  %v333 = vadd.f32 %v41, %v332
  %v334 = vpop.f32.mrb[0].mxu0
  %v335 = vpop.f32.mrb[0].mxu0
  %v336 = vpop.f32.mrb[0].mxu0
  %337 = vdwg.mxu0
  %v338 = vmul.f32 %v333, 0.5
  %v339 = vtanh.pop %v338
  %v340 = vmul.f32 %v339, 0.5
  %v341 = vadd.f32 %v340, 0.5
  %v342 = vtanh.pop %v333
  %v343 = vmul.f32 %v341, %v211
  %345 = vrot.lane.b32.xlu0 %v342, 32
  %v346 = vpop.permute.xlu0 %345
  %v348 = vmul.f32 %v341, %v346
  %350 = vrot.lane.b32.xlu0 %v348, 32
  %v351 = vpop.permute.xlu0 %350
  %v353 = vadd.f32 %v343, %v351
  %v354 = vtanh.pop %v353
  %356 = vrot.lane.b32.xlu0 %v354, 32
  %v357 = vpop.permute.xlu0 %356
  %v359 = vmul.f32 %v341, %v357
  %v360 = vpack.c.bf16 %v359, %v359
  %s361 = scalar_lea.vmem %s0, 16
  %v362 = vld [vmem:[%s361] sm:$0xff]
  %v363 = vsel %vm56, %v289, 0
  %365 = vmatprep.subr.bf16.mxu0 0
  %366 = vmatpush1.bf16.msra.mxu0 %v52
  %367 = vmatprep.subr.bf16.mxu0 0
  %368 = vmatpush1.bf16.msra.mxu0 %v53
  %369 = vmatprep.subr.bf16.mxu0 0
  %370 = vmatpush1.bf16.msra.mxu0 0
  %371 = vmatprep.subr.bf16.mxu0 0
  %372 = vmatpush1.bf16.msra.mxu0 0
  %373 = vmatprep.subr.bf16.mxu0 0
  %374 = vmatpush1.bf16.msra.mxu0 0
  %375 = vmatprep.subr.bf16.mxu0 0
  %376 = vmatpush1.bf16.msra.mxu0 0
  %377 = vmatprep.subr.bf16.mxu0 0
  %378 = vmatpush1.bf16.msra.mxu0 0
  %379 = vmatprep.subr.bf16.mxu0 0
  %380 = vmatpush1.bf16.msra.mxu0 0
  %381 = vmatprep.subr.bf16.mxu0 0
  %382 = vmatpush1.bf16.msra.mxu0 0
  %383 = vmatprep.subr.bf16.mxu0 0
  %384 = vmatpush1.bf16.msra.mxu0 0
  %385 = vmatprep.subr.bf16.mxu0 0
  %386 = vmatpush1.bf16.msra.mxu0 0
  %387 = vmatprep.subr.bf16.mxu0 0
  %388 = vmatpush1.bf16.msra.mxu0 0
  %389 = vmatprep.subr.bf16.mxu0 0
  %390 = vmatpush1.bf16.msra.mxu0 0
  %391 = vmatprep.subr.bf16.mxu0 0
  %392 = vmatpush1.bf16.msra.mxu0 0
  %393 = vmatprep.subr.bf16.mxu0 0
  %394 = vmatpush1.bf16.msra.mxu0 0
  %395 = vmatprep.subr.bf16.mxu0 0
  %396 = vmatpush1.bf16.msra.mxu0 0
  %397 = vmatprep.mubr.bf16.mxu0 0
  %398 = vmatmul.mubr.bf16.gmra.mrb[0].mxu0 %v363
  %v399 = vpop.f32.mrb[0].mxu0
  %v400 = vadd.f32 0.0, %v399
  %v401 = vpop.f32.mrb[0].mxu0
  %v402 = vpop.f32.mrb[0].mxu0
  %v403 = vpop.f32.mrb[0].mxu0
  %404 = vdwg.mxu0
  %v405 = vadd.f32 %v362, %v400
  %v406 = vmul.f32 %v405, 0.5
  %v407 = vtanh.pop %v406
  %v408 = vmul.f32 %v407, 0.5
  %v409 = vadd.f32 %v408, 0.5
  %v410 = vtanh.pop %v405
  %v411 = vmul.f32 %v409, %v279
  %413 = vrot.lane.b32.xlu0 %v410, 32
  %v414 = vpop.permute.xlu0 %413
  %v416 = vmul.f32 %v409, %v414
  %418 = vrot.lane.b32.xlu0 %v416, 32
  %v419 = vpop.permute.xlu0 %418
  %v421 = vadd.f32 %v411, %v419
  %v422 = vtanh.pop %v421
  %424 = vrot.lane.b32.xlu0 %v422, 32
  %v425 = vpop.permute.xlu0 %424
  %v427 = vmul.f32 %v409, %v425
  %v428 = vpack.c.bf16 %v427, %v427
  %430 = vrot.lane.b32.xlu0 %v428, 64
  %v431 = vpop.permute.xlu0 %430
  %433 = vrot.lane.b32.xlu0 %v360, 96
  %v434 = vpop.permute.xlu0 %433
  %v437 = vsel %vm56, %v431, %v434
  %v438 = vsel %vm153, %v437, 0
  %440 = vmatprep.subr.bf16.mxu0 0
  %441 = vmatpush1.bf16.msra.mxu0 %v145
  %442 = vmatprep.subr.bf16.mxu0 0
  %443 = vmatpush1.bf16.msra.mxu0 %v146
  %444 = vmatprep.subr.bf16.mxu0 0
  %445 = vmatpush1.bf16.msra.mxu0 %v147
  %446 = vmatprep.subr.bf16.mxu0 0
  %447 = vmatpush1.bf16.msra.mxu0 %v148
  %448 = vmatprep.subr.bf16.mxu0 0
  %449 = vmatpush1.bf16.msra.mxu0 0
  %450 = vmatprep.subr.bf16.mxu0 0
  %451 = vmatpush1.bf16.msra.mxu0 0
  %452 = vmatprep.subr.bf16.mxu0 0
  %453 = vmatpush1.bf16.msra.mxu0 0
  %454 = vmatprep.subr.bf16.mxu0 0
  %455 = vmatpush1.bf16.msra.mxu0 0
  %456 = vmatprep.subr.bf16.mxu0 0
  %457 = vmatpush1.bf16.msra.mxu0 0
  %458 = vmatprep.subr.bf16.mxu0 0
  %459 = vmatpush1.bf16.msra.mxu0 0
  %460 = vmatprep.subr.bf16.mxu0 0
  %461 = vmatpush1.bf16.msra.mxu0 0
  %462 = vmatprep.subr.bf16.mxu0 0
  %463 = vmatpush1.bf16.msra.mxu0 0
  %464 = vmatprep.subr.bf16.mxu0 0
  %465 = vmatpush1.bf16.msra.mxu0 0
  %466 = vmatprep.subr.bf16.mxu0 0
  %467 = vmatpush1.bf16.msra.mxu0 0
  %468 = vmatprep.subr.bf16.mxu0 0
  %469 = vmatpush1.bf16.msra.mxu0 0
  %470 = vmatprep.subr.bf16.mxu0 0
  %471 = vmatpush1.bf16.msra.mxu0 0
  %472 = vmatprep.mubr.bf16.mxu0 0
  %473 = vmatmul.mubr.bf16.gmra.mrb[0].mxu0 %v438
  %v474 = vpop.f32.mrb[0].mxu0
  %v475 = vadd.f32 %v41, %v474
  %v476 = vpop.f32.mrb[0].mxu0
  %v477 = vpop.f32.mrb[0].mxu0
  %v478 = vpop.f32.mrb[0].mxu0
  %479 = vdwg.mxu0
  %v480 = vmul.f32 %v475, 0.5
  %v481 = vtanh.pop %v480
  %v482 = vmul.f32 %v481, 0.5
  %v483 = vadd.f32 %v482, 0.5
  %v484 = vtanh.pop %v475
  %v485 = vmul.f32 %v483, %v353
  %487 = vrot.lane.b32.xlu0 %v484, 32
  %v488 = vpop.permute.xlu0 %487
  %v490 = vmul.f32 %v483, %v488
  %492 = vrot.lane.b32.xlu0 %v490, 32
  %v493 = vpop.permute.xlu0 %492
  %v495 = vadd.f32 %v485, %v493
  %v496 = vtanh.pop %v495
  %498 = vrot.lane.b32.xlu0 %v496, 32
  %v499 = vpop.permute.xlu0 %498
  %v501 = vmul.f32 %v483, %v499
  %v502 = vpack.c.bf16 %v501, %v501
  %s503 = scalar_lea.vmem %s0, 24
  %v504 = vld [vmem:[%s503] sm:$0xff]
  %v505 = vsel %vm56, %v431, 0
  %507 = vmatprep.subr.bf16.mxu0 0
  %508 = vmatpush1.bf16.msra.mxu0 %v52
  %509 = vmatprep.subr.bf16.mxu0 0
  %510 = vmatpush1.bf16.msra.mxu0 %v53
  %511 = vmatprep.subr.bf16.mxu0 0
  %512 = vmatpush1.bf16.msra.mxu0 0
  %513 = vmatprep.subr.bf16.mxu0 0
  %514 = vmatpush1.bf16.msra.mxu0 0
  %515 = vmatprep.subr.bf16.mxu0 0
  %516 = vmatpush1.bf16.msra.mxu0 0
  %517 = vmatprep.subr.bf16.mxu0 0
  %518 = vmatpush1.bf16.msra.mxu0 0
  %519 = vmatprep.subr.bf16.mxu0 0
  %520 = vmatpush1.bf16.msra.mxu0 0
  %521 = vmatprep.subr.bf16.mxu0 0
  %522 = vmatpush1.bf16.msra.mxu0 0
  %523 = vmatprep.subr.bf16.mxu0 0
  %524 = vmatpush1.bf16.msra.mxu0 0
  %525 = vmatprep.subr.bf16.mxu0 0
  %526 = vmatpush1.bf16.msra.mxu0 0
  %527 = vmatprep.subr.bf16.mxu0 0
  %528 = vmatpush1.bf16.msra.mxu0 0
  %529 = vmatprep.subr.bf16.mxu0 0
  %530 = vmatpush1.bf16.msra.mxu0 0
  %531 = vmatprep.subr.bf16.mxu0 0
  %532 = vmatpush1.bf16.msra.mxu0 0
  %533 = vmatprep.subr.bf16.mxu0 0
  %534 = vmatpush1.bf16.msra.mxu0 0
  %535 = vmatprep.subr.bf16.mxu0 0
  %536 = vmatpush1.bf16.msra.mxu0 0
  %537 = vmatprep.subr.bf16.mxu0 0
  %538 = vmatpush1.bf16.msra.mxu0 0
  %539 = vmatprep.mubr.bf16.mxu0 0
  %540 = vmatmul.mubr.bf16.gmra.mrb[0].mxu0 %v505
  %v541 = vpop.f32.mrb[0].mxu0
  %v542 = vadd.f32 0.0, %v541
  %v543 = vpop.f32.mrb[0].mxu0
  %v544 = vpop.f32.mrb[0].mxu0
  %v545 = vpop.f32.mrb[0].mxu0
  %546 = vdwg.mxu0
  %v547 = vadd.f32 %v504, %v542
  %v548 = vmul.f32 %v547, 0.5
  %v549 = vtanh.pop %v548
  %v550 = vmul.f32 %v549, 0.5
  %v551 = vadd.f32 %v550, 0.5
  %v552 = vtanh.pop %v547
  %v553 = vmul.f32 %v551, %v421
  %555 = vrot.lane.b32.xlu0 %v552, 32
  %v556 = vpop.permute.xlu0 %555
  %v558 = vmul.f32 %v551, %v556
  %560 = vrot.lane.b32.xlu0 %v558, 32
  %v561 = vpop.permute.xlu0 %560
  %v563 = vadd.f32 %v553, %v561
  %v564 = vtanh.pop %v563
  %566 = vrot.lane.b32.xlu0 %v564, 32
  %v567 = vpop.permute.xlu0 %566
  %v569 = vmul.f32 %v551, %v567
  %v570 = vpack.c.bf16 %v569, %v569
  %572 = vrot.lane.b32.xlu0 %v570, 64
  %v573 = vpop.permute.xlu0 %572
  %575 = vrot.lane.b32.xlu0 %v502, 96
  %v576 = vpop.permute.xlu0 %575
  %v579 = vsel %vm56, %v573, %v576
  %v580 = vsel %vm153, %v579, 0
  %582 = vmatprep.subr.bf16.mxu0 0
  %583 = vmatpush1.bf16.msra.mxu0 %v145
  %584 = vmatprep.subr.bf16.mxu0 0
  %585 = vmatpush1.bf16.msra.mxu0 %v146
  %586 = vmatprep.subr.bf16.mxu0 0
  %587 = vmatpush1.bf16.msra.mxu0 %v147
  %588 = vmatprep.subr.bf16.mxu0 0
  %589 = vmatpush1.bf16.msra.mxu0 %v148
  %590 = vmatprep.subr.bf16.mxu0 0
  %591 = vmatpush1.bf16.msra.mxu0 0
  %592 = vmatprep.subr.bf16.mxu0 0
  %593 = vmatpush1.bf16.msra.mxu0 0
  %594 = vmatprep.subr.bf16.mxu0 0
  %595 = vmatpush1.bf16.msra.mxu0 0
  %596 = vmatprep.subr.bf16.mxu0 0
  %597 = vmatpush1.bf16.msra.mxu0 0
  %598 = vmatprep.subr.bf16.mxu0 0
  %599 = vmatpush1.bf16.msra.mxu0 0
  %600 = vmatprep.subr.bf16.mxu0 0
  %601 = vmatpush1.bf16.msra.mxu0 0
  %602 = vmatprep.subr.bf16.mxu0 0
  %603 = vmatpush1.bf16.msra.mxu0 0
  %604 = vmatprep.subr.bf16.mxu0 0
  %605 = vmatpush1.bf16.msra.mxu0 0
  %606 = vmatprep.subr.bf16.mxu0 0
  %607 = vmatpush1.bf16.msra.mxu0 0
  %608 = vmatprep.subr.bf16.mxu0 0
  %609 = vmatpush1.bf16.msra.mxu0 0
  %610 = vmatprep.subr.bf16.mxu0 0
  %611 = vmatpush1.bf16.msra.mxu0 0
  %612 = vmatprep.subr.bf16.mxu0 0
  %613 = vmatpush1.bf16.msra.mxu0 0
  %614 = vmatprep.mubr.bf16.mxu0 0
  %615 = vmatmul.mubr.bf16.gmra.mrb[0].mxu0 %v580
  %v616 = vpop.f32.mrb[0].mxu0
  %v617 = vadd.f32 %v41, %v616
  %v618 = vpop.f32.mrb[0].mxu0
  %v619 = vpop.f32.mrb[0].mxu0
  %v620 = vpop.f32.mrb[0].mxu0
  %621 = vdwg.mxu0
  %v622 = vmul.f32 %v617, 0.5
  %v623 = vtanh.pop %v622
  %v624 = vmul.f32 %v623, 0.5
  %v625 = vadd.f32 %v624, 0.5
  %v626 = vtanh.pop %v617
  %v627 = vmul.f32 %v625, %v495
  %629 = vrot.lane.b32.xlu0 %v626, 32
  %v630 = vpop.permute.xlu0 %629
  %v632 = vmul.f32 %v625, %v630
  %634 = vrot.lane.b32.xlu0 %v632, 32
  %v635 = vpop.permute.xlu0 %634
  %v637 = vadd.f32 %v627, %v635
  %v638 = vtanh.pop %v637
  %640 = vrot.lane.b32.xlu0 %v638, 32
  %v641 = vpop.permute.xlu0 %640
  %v643 = vmul.f32 %v625, %v641
  %v644 = vpack.c.bf16 %v643, %v643
  %s645 = scalar_lea.vmem %s0, 32
  %v646 = vld [vmem:[%s645] sm:$0xff]
  %v647 = vsel %vm56, %v573, 0
  %649 = vmatprep.subr.bf16.mxu0 0
  %650 = vmatpush1.bf16.msra.mxu0 %v52
  %651 = vmatprep.subr.bf16.mxu0 0
  %652 = vmatpush1.bf16.msra.mxu0 %v53
  %653 = vmatprep.subr.bf16.mxu0 0
  %654 = vmatpush1.bf16.msra.mxu0 0
  %655 = vmatprep.subr.bf16.mxu0 0
  %656 = vmatpush1.bf16.msra.mxu0 0
  %657 = vmatprep.subr.bf16.mxu0 0
  %658 = vmatpush1.bf16.msra.mxu0 0
  %659 = vmatprep.subr.bf16.mxu0 0
  %660 = vmatpush1.bf16.msra.mxu0 0
  %661 = vmatprep.subr.bf16.mxu0 0
  %662 = vmatpush1.bf16.msra.mxu0 0
  %663 = vmatprep.subr.bf16.mxu0 0
  %664 = vmatpush1.bf16.msra.mxu0 0
  %665 = vmatprep.subr.bf16.mxu0 0
  %666 = vmatpush1.bf16.msra.mxu0 0
  %667 = vmatprep.subr.bf16.mxu0 0
  %668 = vmatpush1.bf16.msra.mxu0 0
  %669 = vmatprep.subr.bf16.mxu0 0
  %670 = vmatpush1.bf16.msra.mxu0 0
  %671 = vmatprep.subr.bf16.mxu0 0
  %672 = vmatpush1.bf16.msra.mxu0 0
  %673 = vmatprep.subr.bf16.mxu0 0
  %674 = vmatpush1.bf16.msra.mxu0 0
  %675 = vmatprep.subr.bf16.mxu0 0
  %676 = vmatpush1.bf16.msra.mxu0 0
  %677 = vmatprep.subr.bf16.mxu0 0
  %678 = vmatpush1.bf16.msra.mxu0 0
  %679 = vmatprep.subr.bf16.mxu0 0
  %680 = vmatpush1.bf16.msra.mxu0 0
  %681 = vmatprep.mubr.bf16.mxu0 0
  %682 = vmatmul.mubr.bf16.gmra.mrb[0].mxu0 %v647
  %v683 = vpop.f32.mrb[0].mxu0
  %v684 = vadd.f32 0.0, %v683
  %v685 = vpop.f32.mrb[0].mxu0
  %v686 = vpop.f32.mrb[0].mxu0
  %v687 = vpop.f32.mrb[0].mxu0
  %688 = vdwg.mxu0
  %v689 = vadd.f32 %v646, %v684
  %v690 = vmul.f32 %v689, 0.5
  %v691 = vtanh.pop %v690
  %v692 = vmul.f32 %v691, 0.5
  %v693 = vadd.f32 %v692, 0.5
  %v694 = vtanh.pop %v689
  %v695 = vmul.f32 %v693, %v563
  %697 = vrot.lane.b32.xlu0 %v694, 32
  %v698 = vpop.permute.xlu0 %697
  %v700 = vmul.f32 %v693, %v698
  %702 = vrot.lane.b32.xlu0 %v700, 32
  %v703 = vpop.permute.xlu0 %702
  %v705 = vadd.f32 %v695, %v703
  %v706 = vtanh.pop %v705
  %708 = vrot.lane.b32.xlu0 %v706, 32
  %v709 = vpop.permute.xlu0 %708
  %v711 = vmul.f32 %v693, %v709
  %v712 = vpack.c.bf16 %v711, %v711
  %714 = vrot.lane.b32.xlu0 %v712, 64
  %v715 = vpop.permute.xlu0 %714
  %717 = vrot.lane.b32.xlu0 %v644, 96
  %v718 = vpop.permute.xlu0 %717
  %v721 = vsel %vm56, %v715, %v718
  %v722 = vsel %vm153, %v721, 0
  %724 = vmatprep.subr.bf16.mxu0 0
  %725 = vmatpush1.bf16.msra.mxu0 %v145
  %726 = vmatprep.subr.bf16.mxu0 0
  %727 = vmatpush1.bf16.msra.mxu0 %v146
  %728 = vmatprep.subr.bf16.mxu0 0
  %729 = vmatpush1.bf16.msra.mxu0 %v147
  %730 = vmatprep.subr.bf16.mxu0 0
  %731 = vmatpush1.bf16.msra.mxu0 %v148
  %732 = vmatprep.subr.bf16.mxu0 0
  %733 = vmatpush1.bf16.msra.mxu0 0
  %734 = vmatprep.subr.bf16.mxu0 0
  %735 = vmatpush1.bf16.msra.mxu0 0
  %736 = vmatprep.subr.bf16.mxu0 0
  %737 = vmatpush1.bf16.msra.mxu0 0
  %738 = vmatprep.subr.bf16.mxu0 0
  %739 = vmatpush1.bf16.msra.mxu0 0
  %740 = vmatprep.subr.bf16.mxu0 0
  %741 = vmatpush1.bf16.msra.mxu0 0
  %742 = vmatprep.subr.bf16.mxu0 0
  %743 = vmatpush1.bf16.msra.mxu0 0
  %744 = vmatprep.subr.bf16.mxu0 0
  %745 = vmatpush1.bf16.msra.mxu0 0
  %746 = vmatprep.subr.bf16.mxu0 0
  %747 = vmatpush1.bf16.msra.mxu0 0
  %748 = vmatprep.subr.bf16.mxu0 0
  %749 = vmatpush1.bf16.msra.mxu0 0
  %750 = vmatprep.subr.bf16.mxu0 0
  %751 = vmatpush1.bf16.msra.mxu0 0
  %752 = vmatprep.subr.bf16.mxu0 0
  %753 = vmatpush1.bf16.msra.mxu0 0
  %754 = vmatprep.subr.bf16.mxu0 0
  %755 = vmatpush1.bf16.msra.mxu0 0
  %756 = vmatprep.mubr.bf16.mxu0 0
  %757 = vmatmul.mubr.bf16.gmra.mrb[0].mxu0 %v722
  %v758 = vpop.f32.mrb[0].mxu0
  %v759 = vadd.f32 %v41, %v758
  %v760 = vpop.f32.mrb[0].mxu0
  %v761 = vpop.f32.mrb[0].mxu0
  %v762 = vpop.f32.mrb[0].mxu0
  %763 = vdwg.mxu0
  %v764 = vmul.f32 %v759, 0.5
  %v765 = vtanh.pop %v764
  %v766 = vmul.f32 %v765, 0.5
  %v767 = vadd.f32 %v766, 0.5
  %v768 = vtanh.pop %v759
  %v769 = vmul.f32 %v767, %v637
  %771 = vrot.lane.b32.xlu0 %v768, 32
  %v772 = vpop.permute.xlu0 %771
  %v774 = vmul.f32 %v767, %v772
  %776 = vrot.lane.b32.xlu0 %v774, 32
  %v777 = vpop.permute.xlu0 %776
  %v779 = vadd.f32 %v769, %v777
  %v780 = vtanh.pop %v779
  %782 = vrot.lane.b32.xlu0 %v780, 32
  %v783 = vpop.permute.xlu0 %782
  %v785 = vmul.f32 %v767, %v783
  %v786 = vpack.c.bf16 %v785, %v785
  %s787 = scalar_lea.vmem %s0, 40
  %v788 = vld [vmem:[%s787] sm:$0xff]
  %v789 = vsel %vm56, %v715, 0
  %791 = vmatprep.subr.bf16.mxu0 0
  %792 = vmatpush1.bf16.msra.mxu0 %v52
  %793 = vmatprep.subr.bf16.mxu0 0
  %794 = vmatpush1.bf16.msra.mxu0 %v53
  %795 = vmatprep.subr.bf16.mxu0 0
  %796 = vmatpush1.bf16.msra.mxu0 0
  %797 = vmatprep.subr.bf16.mxu0 0
  %798 = vmatpush1.bf16.msra.mxu0 0
  %799 = vmatprep.subr.bf16.mxu0 0
  %800 = vmatpush1.bf16.msra.mxu0 0
  %801 = vmatprep.subr.bf16.mxu0 0
  %802 = vmatpush1.bf16.msra.mxu0 0
  %803 = vmatprep.subr.bf16.mxu0 0
  %804 = vmatpush1.bf16.msra.mxu0 0
  %805 = vmatprep.subr.bf16.mxu0 0
  %806 = vmatpush1.bf16.msra.mxu0 0
  %807 = vmatprep.subr.bf16.mxu0 0
  %808 = vmatpush1.bf16.msra.mxu0 0
  %809 = vmatprep.subr.bf16.mxu0 0
  %810 = vmatpush1.bf16.msra.mxu0 0
  %811 = vmatprep.subr.bf16.mxu0 0
  %812 = vmatpush1.bf16.msra.mxu0 0
  %813 = vmatprep.subr.bf16.mxu0 0
  %814 = vmatpush1.bf16.msra.mxu0 0
  %815 = vmatprep.subr.bf16.mxu0 0
  %816 = vmatpush1.bf16.msra.mxu0 0
  %817 = vmatprep.subr.bf16.mxu0 0
  %818 = vmatpush1.bf16.msra.mxu0 0
  %819 = vmatprep.subr.bf16.mxu0 0
  %820 = vmatpush1.bf16.msra.mxu0 0
  %821 = vmatprep.subr.bf16.mxu0 0
  %822 = vmatpush1.bf16.msra.mxu0 0
  %823 = vmatprep.mubr.bf16.mxu0 0
  %824 = vmatmul.mubr.bf16.gmra.mrb[0].mxu0 %v789
  %v825 = vpop.f32.mrb[0].mxu0
  %v826 = vadd.f32 0.0, %v825
  %v827 = vpop.f32.mrb[0].mxu0
  %v828 = vpop.f32.mrb[0].mxu0
  %v829 = vpop.f32.mrb[0].mxu0
  %830 = vdwg.mxu0
  %v831 = vadd.f32 %v788, %v826
  %v832 = vmul.f32 %v831, 0.5
  %v833 = vtanh.pop %v832
  %v834 = vmul.f32 %v833, 0.5
  %v835 = vadd.f32 %v834, 0.5
  %v836 = vtanh.pop %v831
  %v837 = vmul.f32 %v835, %v705
  %839 = vrot.lane.b32.xlu0 %v836, 32
  %v840 = vpop.permute.xlu0 %839
  %v842 = vmul.f32 %v835, %v840
  %844 = vrot.lane.b32.xlu0 %v842, 32
  %v845 = vpop.permute.xlu0 %844
  %v847 = vadd.f32 %v837, %v845
  %v848 = vtanh.pop %v847
  %850 = vrot.lane.b32.xlu0 %v848, 32
  %v851 = vpop.permute.xlu0 %850
  %v853 = vmul.f32 %v835, %v851
  %v854 = vpack.c.bf16 %v853, %v853
  %856 = vrot.lane.b32.xlu0 %v854, 64
  %v857 = vpop.permute.xlu0 %856
  %859 = vrot.lane.b32.xlu0 %v786, 96
  %v860 = vpop.permute.xlu0 %859
  %v863 = vsel %vm56, %v857, %v860
  %v864 = vsel %vm153, %v863, 0
  %866 = vmatprep.subr.bf16.mxu0 0
  %867 = vmatpush1.bf16.msra.mxu0 %v145
  %868 = vmatprep.subr.bf16.mxu0 0
  %869 = vmatpush1.bf16.msra.mxu0 %v146
  %870 = vmatprep.subr.bf16.mxu0 0
  %871 = vmatpush1.bf16.msra.mxu0 %v147
  %872 = vmatprep.subr.bf16.mxu0 0
  %873 = vmatpush1.bf16.msra.mxu0 %v148
  %874 = vmatprep.subr.bf16.mxu0 0
  %875 = vmatpush1.bf16.msra.mxu0 0
  %876 = vmatprep.subr.bf16.mxu0 0
  %877 = vmatpush1.bf16.msra.mxu0 0
  %878 = vmatprep.subr.bf16.mxu0 0
  %879 = vmatpush1.bf16.msra.mxu0 0
  %880 = vmatprep.subr.bf16.mxu0 0
  %881 = vmatpush1.bf16.msra.mxu0 0
  %882 = vmatprep.subr.bf16.mxu0 0
  %883 = vmatpush1.bf16.msra.mxu0 0
  %884 = vmatprep.subr.bf16.mxu0 0
  %885 = vmatpush1.bf16.msra.mxu0 0
  %886 = vmatprep.subr.bf16.mxu0 0
  %887 = vmatpush1.bf16.msra.mxu0 0
  %888 = vmatprep.subr.bf16.mxu0 0
  %889 = vmatpush1.bf16.msra.mxu0 0
  %890 = vmatprep.subr.bf16.mxu0 0
  %891 = vmatpush1.bf16.msra.mxu0 0
  %892 = vmatprep.subr.bf16.mxu0 0
  %893 = vmatpush1.bf16.msra.mxu0 0
  %894 = vmatprep.subr.bf16.mxu0 0
  %895 = vmatpush1.bf16.msra.mxu0 0
  %896 = vmatprep.subr.bf16.mxu0 0
  %897 = vmatpush1.bf16.msra.mxu0 0
  %898 = vmatprep.mubr.bf16.mxu0 0
  %899 = vmatmul.mubr.bf16.gmra.mrb[0].mxu0 %v864
  %v900 = vpop.f32.mrb[0].mxu0
  %v901 = vadd.f32 %v41, %v900
  %v902 = vpop.f32.mrb[0].mxu0
  %v903 = vpop.f32.mrb[0].mxu0
  %v904 = vpop.f32.mrb[0].mxu0
  %905 = vdwg.mxu0
  %v906 = vmul.f32 %v901, 0.5
  %v907 = vtanh.pop %v906
  %v908 = vmul.f32 %v907, 0.5
  %v909 = vadd.f32 %v908, 0.5
  %v910 = vtanh.pop %v901
  %v911 = vmul.f32 %v909, %v779
  %913 = vrot.lane.b32.xlu0 %v910, 32
  %v914 = vpop.permute.xlu0 %913
  %v916 = vmul.f32 %v909, %v914
  %918 = vrot.lane.b32.xlu0 %v916, 32
  %v919 = vpop.permute.xlu0 %918
  %v921 = vadd.f32 %v911, %v919
  %v922 = vtanh.pop %v921
  %924 = vrot.lane.b32.xlu0 %v922, 32
  %v925 = vpop.permute.xlu0 %924
  %v927 = vmul.f32 %v909, %v925
  %v928 = vpack.c.bf16 %v927, %v927
  %s929 = scalar_lea.vmem %s0, 48
  %v930 = vld [vmem:[%s929] sm:$0xff]
  %v931 = vsel %vm56, %v857, 0
  %933 = vmatprep.subr.bf16.mxu0 0
  %934 = vmatpush1.bf16.msra.mxu0 %v52
  %935 = vmatprep.subr.bf16.mxu0 0
  %936 = vmatpush1.bf16.msra.mxu0 %v53
  %937 = vmatprep.subr.bf16.mxu0 0
  %938 = vmatpush1.bf16.msra.mxu0 0
  %939 = vmatprep.subr.bf16.mxu0 0
  %940 = vmatpush1.bf16.msra.mxu0 0
  %941 = vmatprep.subr.bf16.mxu0 0
  %942 = vmatpush1.bf16.msra.mxu0 0
  %943 = vmatprep.subr.bf16.mxu0 0
  %944 = vmatpush1.bf16.msra.mxu0 0
  %945 = vmatprep.subr.bf16.mxu0 0
  %946 = vmatpush1.bf16.msra.mxu0 0
  %947 = vmatprep.subr.bf16.mxu0 0
  %948 = vmatpush1.bf16.msra.mxu0 0
  %949 = vmatprep.subr.bf16.mxu0 0
  %950 = vmatpush1.bf16.msra.mxu0 0
  %951 = vmatprep.subr.bf16.mxu0 0
  %952 = vmatpush1.bf16.msra.mxu0 0
  %953 = vmatprep.subr.bf16.mxu0 0
  %954 = vmatpush1.bf16.msra.mxu0 0
  %955 = vmatprep.subr.bf16.mxu0 0
  %956 = vmatpush1.bf16.msra.mxu0 0
  %957 = vmatprep.subr.bf16.mxu0 0
  %958 = vmatpush1.bf16.msra.mxu0 0
  %959 = vmatprep.subr.bf16.mxu0 0
  %960 = vmatpush1.bf16.msra.mxu0 0
  %961 = vmatprep.subr.bf16.mxu0 0
  %962 = vmatpush1.bf16.msra.mxu0 0
  %963 = vmatprep.subr.bf16.mxu0 0
  %964 = vmatpush1.bf16.msra.mxu0 0
  %965 = vmatprep.mubr.bf16.mxu0 0
  %966 = vmatmul.mubr.bf16.gmra.mrb[0].mxu0 %v931
  %v967 = vpop.f32.mrb[0].mxu0
  %v968 = vadd.f32 0.0, %v967
  %v969 = vpop.f32.mrb[0].mxu0
  %v970 = vpop.f32.mrb[0].mxu0
  %v971 = vpop.f32.mrb[0].mxu0
  %972 = vdwg.mxu0
  %v973 = vadd.f32 %v930, %v968
  %v974 = vmul.f32 %v973, 0.5
  %v975 = vtanh.pop %v974
  %v976 = vmul.f32 %v975, 0.5
  %v977 = vadd.f32 %v976, 0.5
  %v978 = vtanh.pop %v973
  %v979 = vmul.f32 %v977, %v847
  %981 = vrot.lane.b32.xlu0 %v978, 32
  %v982 = vpop.permute.xlu0 %981
  %v984 = vmul.f32 %v977, %v982
  %986 = vrot.lane.b32.xlu0 %v984, 32
  %v987 = vpop.permute.xlu0 %986
  %v989 = vadd.f32 %v979, %v987
  %v990 = vtanh.pop %v989
  %992 = vrot.lane.b32.xlu0 %v990, 32
  %v993 = vpop.permute.xlu0 %992
  %v995 = vmul.f32 %v977, %v993
  %v996 = vpack.c.bf16 %v995, %v995
  %998 = vrot.lane.b32.xlu0 %v996, 64
  %v999 = vpop.permute.xlu0 %998
  %1001 = vrot.lane.b32.xlu0 %v928, 96
  %v1002 = vpop.permute.xlu0 %1001
  %v1005 = vsel %vm56, %v999, %v1002
  %v1006 = vsel %vm153, %v1005, 0
  %1008 = vmatprep.subr.bf16.mxu0 0
  %1009 = vmatpush1.bf16.msra.mxu0 %v145
  %1010 = vmatprep.subr.bf16.mxu0 0
  %1011 = vmatpush1.bf16.msra.mxu0 %v146
  %1012 = vmatprep.subr.bf16.mxu0 0
  %1013 = vmatpush1.bf16.msra.mxu0 %v147
  %1014 = vmatprep.subr.bf16.mxu0 0
  %1015 = vmatpush1.bf16.msra.mxu0 %v148
  %1016 = vmatprep.subr.bf16.mxu0 0
  %1017 = vmatpush1.bf16.msra.mxu0 0
  %1018 = vmatprep.subr.bf16.mxu0 0
  %1019 = vmatpush1.bf16.msra.mxu0 0
  %1020 = vmatprep.subr.bf16.mxu0 0
  %1021 = vmatpush1.bf16.msra.mxu0 0
  %1022 = vmatprep.subr.bf16.mxu0 0
  %1023 = vmatpush1.bf16.msra.mxu0 0
  %1024 = vmatprep.subr.bf16.mxu0 0
  %1025 = vmatpush1.bf16.msra.mxu0 0
  %1026 = vmatprep.subr.bf16.mxu0 0
  %1027 = vmatpush1.bf16.msra.mxu0 0
  %1028 = vmatprep.subr.bf16.mxu0 0
  %1029 = vmatpush1.bf16.msra.mxu0 0
  %1030 = vmatprep.subr.bf16.mxu0 0
  %1031 = vmatpush1.bf16.msra.mxu0 0
  %1032 = vmatprep.subr.bf16.mxu0 0
  %1033 = vmatpush1.bf16.msra.mxu0 0
  %1034 = vmatprep.subr.bf16.mxu0 0
  %1035 = vmatpush1.bf16.msra.mxu0 0
  %1036 = vmatprep.subr.bf16.mxu0 0
  %1037 = vmatpush1.bf16.msra.mxu0 0
  %1038 = vmatprep.subr.bf16.mxu0 0
  %1039 = vmatpush1.bf16.msra.mxu0 0
  %1040 = vmatprep.mubr.bf16.mxu0 0
  %1041 = vmatmul.mubr.bf16.gmra.mrb[0].mxu0 %v1006
  %v1042 = vpop.f32.mrb[0].mxu0
  %v1043 = vadd.f32 %v41, %v1042
  %v1044 = vpop.f32.mrb[0].mxu0
  %v1045 = vpop.f32.mrb[0].mxu0
  %v1046 = vpop.f32.mrb[0].mxu0
  %1047 = vdwg.mxu0
  %v1048 = vmul.f32 %v1043, 0.5
  %v1049 = vtanh.pop %v1048
  %v1050 = vmul.f32 %v1049, 0.5
  %v1051 = vadd.f32 %v1050, 0.5
  %v1052 = vtanh.pop %v1043
  %v1053 = vmul.f32 %v1051, %v921
  %1055 = vrot.lane.b32.xlu0 %v1052, 32
  %v1056 = vpop.permute.xlu0 %1055
  %v1058 = vmul.f32 %v1051, %v1056
  %1060 = vrot.lane.b32.xlu0 %v1058, 32
  %v1061 = vpop.permute.xlu0 %1060
  %v1063 = vadd.f32 %v1053, %v1061
  %v1064 = vtanh.pop %v1063
  %1066 = vrot.lane.b32.xlu0 %v1064, 32
  %v1067 = vpop.permute.xlu0 %1066
  %v1069 = vmul.f32 %v1051, %v1067
  %v1070 = vpack.c.bf16 %v1069, %v1069
  %s1071 = scalar_lea.vmem %s0, 56
  %v1072 = vld [vmem:[%s1071] sm:$0xff]
  %v1073 = vsel %vm56, %v999, 0
  %1075 = vmatprep.subr.bf16.mxu0 0
  %1076 = vmatpush1.bf16.msra.mxu0 %v52
  %1077 = vmatprep.subr.bf16.mxu0 0
  %1078 = vmatpush1.bf16.msra.mxu0 %v53
  %1079 = vmatprep.subr.bf16.mxu0 0
  %1080 = vmatpush1.bf16.msra.mxu0 0
  %1081 = vmatprep.subr.bf16.mxu0 0
  %1082 = vmatpush1.bf16.msra.mxu0 0
  %1083 = vmatprep.subr.bf16.mxu0 0
  %1084 = vmatpush1.bf16.msra.mxu0 0
  %1085 = vmatprep.subr.bf16.mxu0 0
  %1086 = vmatpush1.bf16.msra.mxu0 0
  %1087 = vmatprep.subr.bf16.mxu0 0
  %1088 = vmatpush1.bf16.msra.mxu0 0
  %1089 = vmatprep.subr.bf16.mxu0 0
  %1090 = vmatpush1.bf16.msra.mxu0 0
  %1091 = vmatprep.subr.bf16.mxu0 0
  %1092 = vmatpush1.bf16.msra.mxu0 0
  %1093 = vmatprep.subr.bf16.mxu0 0
  %1094 = vmatpush1.bf16.msra.mxu0 0
  %1095 = vmatprep.subr.bf16.mxu0 0
  %1096 = vmatpush1.bf16.msra.mxu0 0
  %1097 = vmatprep.subr.bf16.mxu0 0
  %1098 = vmatpush1.bf16.msra.mxu0 0
  %1099 = vmatprep.subr.bf16.mxu0 0
  %1100 = vmatpush1.bf16.msra.mxu0 0
  %1101 = vmatprep.subr.bf16.mxu0 0
  %1102 = vmatpush1.bf16.msra.mxu0 0
  %1103 = vmatprep.subr.bf16.mxu0 0
  %1104 = vmatpush1.bf16.msra.mxu0 0
  %1105 = vmatprep.subr.bf16.mxu0 0
  %1106 = vmatpush1.bf16.msra.mxu0 0
  %1107 = vmatprep.mubr.bf16.mxu0 0
  %1108 = vmatmul.mubr.bf16.gmra.mrb[0].mxu0 %v1073
  %v1109 = vpop.f32.mrb[0].mxu0
  %v1110 = vadd.f32 0.0, %v1109
  %v1111 = vpop.f32.mrb[0].mxu0
  %v1112 = vpop.f32.mrb[0].mxu0
  %v1113 = vpop.f32.mrb[0].mxu0
  %1114 = vdwg.mxu0
  %v1115 = vadd.f32 %v1072, %v1110
  %v1116 = vmul.f32 %v1115, 0.5
  %v1117 = vtanh.pop %v1116
  %v1118 = vmul.f32 %v1117, 0.5
  %v1119 = vadd.f32 %v1118, 0.5
  %v1120 = vtanh.pop %v1115
  %v1121 = vmul.f32 %v1119, %v989
  %1123 = vrot.lane.b32.xlu0 %v1120, 32
  %v1124 = vpop.permute.xlu0 %1123
  %v1126 = vmul.f32 %v1119, %v1124
  %1128 = vrot.lane.b32.xlu0 %v1126, 32
  %v1129 = vpop.permute.xlu0 %1128
  %v1131 = vadd.f32 %v1121, %v1129
  %v1132 = vtanh.pop %v1131
  %1134 = vrot.lane.b32.xlu0 %v1132, 32
  %v1135 = vpop.permute.xlu0 %1134
  %v1137 = vmul.f32 %v1119, %v1135
  %v1138 = vpack.c.bf16 %v1137, %v1137
  %1140 = vrot.lane.b32.xlu0 %v1138, 64
  %v1141 = vpop.permute.xlu0 %1140
  %1143 = vrot.lane.b32.xlu0 %v1070, 96
  %v1144 = vpop.permute.xlu0 %1143
  %v1147 = vsel %vm56, %v1141, %v1144
  %v1148 = vsel %vm153, %v1147, 0
  %1150 = vmatprep.subr.bf16.mxu0 0
  %1151 = vmatpush1.bf16.msra.mxu0 %v145
  %1152 = vmatprep.subr.bf16.mxu0 0
  %1153 = vmatpush1.bf16.msra.mxu0 %v146
  %1154 = vmatprep.subr.bf16.mxu0 0
  %1155 = vmatpush1.bf16.msra.mxu0 %v147
  %1156 = vmatprep.subr.bf16.mxu0 0
  %1157 = vmatpush1.bf16.msra.mxu0 %v148
  %1158 = vmatprep.subr.bf16.mxu0 0
  %1159 = vmatpush1.bf16.msra.mxu0 0
  %1160 = vmatprep.subr.bf16.mxu0 0
  %1161 = vmatpush1.bf16.msra.mxu0 0
  %1162 = vmatprep.subr.bf16.mxu0 0
  %1163 = vmatpush1.bf16.msra.mxu0 0
  %1164 = vmatprep.subr.bf16.mxu0 0
  %1165 = vmatpush1.bf16.msra.mxu0 0
  %1166 = vmatprep.subr.bf16.mxu0 0
  %1167 = vmatpush1.bf16.msra.mxu0 0
  %1168 = vmatprep.subr.bf16.mxu0 0
  %1169 = vmatpush1.bf16.msra.mxu0 0
  %1170 = vmatprep.subr.bf16.mxu0 0
  %1171 = vmatpush1.bf16.msra.mxu0 0
  %1172 = vmatprep.subr.bf16.mxu0 0
  %1173 = vmatpush1.bf16.msra.mxu0 0
  %1174 = vmatprep.subr.bf16.mxu0 0
  %1175 = vmatpush1.bf16.msra.mxu0 0
  %1176 = vmatprep.subr.bf16.mxu0 0
  %1177 = vmatpush1.bf16.msra.mxu0 0
  %1178 = vmatprep.subr.bf16.mxu0 0
  %1179 = vmatpush1.bf16.msra.mxu0 0
  %1180 = vmatprep.subr.bf16.mxu0 0
  %1181 = vmatpush1.bf16.msra.mxu0 0
  %1182 = vmatprep.mubr.bf16.mxu0 0
  %1183 = vmatmul.mubr.bf16.gmra.mrb[0].mxu0 %v1148
  %v1184 = vpop.f32.mrb[0].mxu0
  %v1185 = vadd.f32 %v41, %v1184
  %v1186 = vpop.f32.mrb[0].mxu0
  %v1187 = vpop.f32.mrb[0].mxu0
  %v1188 = vpop.f32.mrb[0].mxu0
  %1189 = vdwg.mxu0
  %v1190 = vmul.f32 %v1185, 0.5
  %v1191 = vtanh.pop %v1190
  %v1192 = vmul.f32 %v1191, 0.5
  %v1193 = vadd.f32 %v1192, 0.5
  %v1194 = vtanh.pop %v1185
  %v1195 = vmul.f32 %v1193, %v1063
  %1197 = vrot.lane.b32.xlu0 %v1194, 32
  %v1198 = vpop.permute.xlu0 %1197
  %v1200 = vmul.f32 %v1193, %v1198
  %1202 = vrot.lane.b32.xlu0 %v1200, 32
  %v1203 = vpop.permute.xlu0 %1202
  %v1205 = vadd.f32 %v1195, %v1203
  %v1206 = vtanh.pop %v1205
  %1208 = vrot.lane.b32.xlu0 %v1206, 32
  %v1209 = vpop.permute.xlu0 %1208
  %v1211 = vmul.f32 %v1193, %v1209
  %v1212 = vpack.c.bf16 %v1211, %v1211
  %v1213 = vld [vmem:[%s4] sm:$0xf]
  %v1214 = vld [vmem:[%s4 + $0x4] sm:$0xf]
  %v1215 = vld [vmem:[%s4 + $0x8] sm:$0xf]
  %v1216 = vld [vmem:[%s4 + $0xc] sm:$0xf]
  %v1217 = vld [vmem:[%s5] sm:$0x1]
  %v1219 = vlaneseq
  %v1220 = vshrl.u32 %v1219, 7
  %v1221 = vsub.s32 0, %v1220
  %v1222 = vrot.slane %v1217, %v1221
  %1225 = vrot.lane.b32.xlu0 %v1212, 64
  %v1226 = vpop.permute.xlu0 %1225
  %v1231 = vunpack.c.l.b16 %v1213
  %v1232 = vunpack.c.l.b16 %v1214
  %v1233 = vunpack.c.l.b16 %v1215
  %v1234 = vunpack.c.l.b16 %v1216
  %v1235 = vpack.c.b16 %v1232, %v1231
  %v1236 = vpack.c.b16 %v1234, %v1233
  %v1240 = vsel %vm56, %v1226, 0
  %1242 = vmatprep.subr.bf16.mxu0 0
  %1243 = vmatpush1.bf16.msra.mxu0 %v1235
  %1244 = vmatprep.subr.bf16.mxu0 0
  %1245 = vmatpush1.bf16.msra.mxu0 %v1236
  %1246 = vmatprep.subr.bf16.mxu0 0
  %1247 = vmatpush1.bf16.msra.mxu0 0
  %1248 = vmatprep.subr.bf16.mxu0 0
  %1249 = vmatpush1.bf16.msra.mxu0 0
  %1250 = vmatprep.subr.bf16.mxu0 0
  %1251 = vmatpush1.bf16.msra.mxu0 0
  %1252 = vmatprep.subr.bf16.mxu0 0
  %1253 = vmatpush1.bf16.msra.mxu0 0
  %1254 = vmatprep.subr.bf16.mxu0 0
  %1255 = vmatpush1.bf16.msra.mxu0 0
  %1256 = vmatprep.subr.bf16.mxu0 0
  %1257 = vmatpush1.bf16.msra.mxu0 0
  %1258 = vmatprep.subr.bf16.mxu0 0
  %1259 = vmatpush1.bf16.msra.mxu0 0
  %1260 = vmatprep.subr.bf16.mxu0 0
  %1261 = vmatpush1.bf16.msra.mxu0 0
  %1262 = vmatprep.subr.bf16.mxu0 0
  %1263 = vmatpush1.bf16.msra.mxu0 0
  %1264 = vmatprep.subr.bf16.mxu0 0
  %1265 = vmatpush1.bf16.msra.mxu0 0
  %1266 = vmatprep.subr.bf16.mxu0 0
  %1267 = vmatpush1.bf16.msra.mxu0 0
  %1268 = vmatprep.subr.bf16.mxu0 0
  %1269 = vmatpush1.bf16.msra.mxu0 0
  %1270 = vmatprep.subr.bf16.mxu0 0
  %1271 = vmatpush1.bf16.msra.mxu0 0
  %1272 = vmatprep.subr.bf16.mxu0 0
  %1273 = vmatpush1.bf16.msra.mxu0 0
  %1274 = vmatprep.mubr.bf16.mxu0 0
  %1275 = vmatmul.mubr.bf16.gmra.mrb[0].mxu0 %v1240
  %v1276 = vpop.f32.mrb[0].mxu0
  %v1277 = vadd.f32 %v1222, %v1276
  %v1278 = vpop.f32.mrb[0].mxu0
  %v1279 = vpop.f32.mrb[0].mxu0
  %v1280 = vpop.f32.mrb[0].mxu0
  %1281 = vdwg.mxu0
  %1282 = vst [vmem:[%s6] sm:$0xff] %v1277
  // Predicated region
  $region26: #{_lambda_.1} parent=0 // pred_check
    _
  $region27: #{_lambda_.1} parent=0 // pred_check_branch
    %1284 = sbr.rel (0) target = $region29
  $region28: #{_lambda_.1} parent=0 // pred_region
    _
  $region29: #{_lambda_.1} parent=0 // pred_fallthru
    _
  // Predicated region
  $region30: #{_lambda_.1} parent=0 // pred_check
    _
  $region31: #{_lambda_.1} parent=0 // pred_check_branch
    %1286 = sbr.rel (0) target = $region33
  $region32: #{_lambda_.1} parent=0 // pred_region
    _
  $region33: #{_lambda_.1} parent=0 // pred_fallthru
    _

</llo_original>
